<compile_context>
chip_gen: v6e
topology: v6e:2x2x1
jax: 0.10.0
libtpu: 0.0.40
codegen_flags: <defaults>
</compile_context>

<pallas_src>
import functools

import numpy as np
import jax
import jax.numpy as jnp
from jax import lax
from jax.experimental import pallas as pl
from jax.experimental.pallas import tpu as pltpu

PRIMITIVES = ("none", "max_pool_3x3", "avg_pool_3x3", "skip_connect", "sep_conv_3x3")
WEIGHT_THRESHOLD = 0.01
TOP_K = 3
BN_EPS = 1e-5
_NEG = -1e30    # stand-in for -inf max-pool padding (center tap is always valid)


def _fast_mixed_op_kernel(w_ref, x_ref, widx_ref, invc_ref,
                          dw1_ref, pwc1_ref, dw2_ref, pwc2_ref,
                          bnr_ref, bnb_ref, o_ref, acc_ref, *, N, H, W, C):
    NWC = N * W * C
    x = x_ref[...]                                    # (H, NWC) f32

    # ---- edge-validity masks: computed ONCE, hoisted out of every tap loop -----------------
    h_idx = lax.broadcasted_iota(jnp.int32, (H, 1), 0)
    h_lo = h_idx > 0                    # row h-1 exists
    h_hi = h_idx < H - 1                # row h+1 exists
    h_lo_f = h_lo.astype(jnp.float32)
    h_hi_f = h_hi.astype(jnp.float32)
    w_idx = widx_ref[...]               # (1, NWC) int32: spatial w of every lane
    w_lo = w_idx > 0
    w_hi = w_idx < W - 1
    w_lo_f = w_lo.astype(jnp.float32)
    w_hi_f = w_hi.astype(jnp.float32)

    SH_UP, SH_DN = 1, H - 1             # sublane shifts: bring x[h-1] / x[h+1] to row h
    SH_L, SH_R = C, (NWC - C) % NWC     # lane shifts: bring w-1 / w+1 to position w

    def batch_norm(v, out_scale):
        # BatchNorm2d(C, affine=False), training-mode biased batch stats over (N, H, W).
        # Single pass: per-lane sum / sum-of-squares, reduced to per-channel with a (NWC, Cp)
        # matrix (1/(N*H*W) pre-folded) and broadcast back with a (Cp, NWC) matrix.
        # The per-primitive mix weight is folded into the normalization scale.
        s1 = jnp.sum(v, axis=0, keepdims=True)                    # (1, NWC)
        s2 = jnp.sum(v * v, axis=0, keepdims=True)                # (1, NWC)
        st = jnp.concatenate([s1, s2], axis=0)                    # (2, NWC)
        red = jnp.dot(st, bnr_ref[...], preferred_element_type=jnp.float32)   # (2, Cp) = means
        rep = jnp.dot(red, bnb_ref[...], preferred_element_type=jnp.float32)  # (2, NWC)
        mean = rep[0:1, :]
        var = jnp.maximum(rep[1:2, :] - mean * mean, 0.0)         # clamp: E[x^2]-m^2 can dip <0
        return (v - mean) * (out_scale * lax.rsqrt(var + BN_EPS))

    def max_pool_3x3(v):
        # Separable 3x3 max: column pass (sublane rolls) then row pass (lane rolls).
        up = jnp.where(h_lo, pltpu.roll(v, shift=SH_UP, axis=0), _NEG)
        dn = jnp.where(h_hi, pltpu.roll(v, shift=SH_DN, axis=0), _NEG)
        col = jnp.maximum(jnp.maximum(up, dn), v)
        lf = jnp.where(w_lo, pltpu.roll(col, shift=SH_L, axis=1), _NEG)
        rt = jnp.where(w_hi, pltpu.roll(col, shift=SH_R, axis=1), _NEG)
        return jnp.maximum(jnp.maximum(lf, rt), col)

    def avg_pool_3x3(v):
        # Separable 3x3 sum; count_include_pad=False handled by the precomputed reciprocal count.
        up = pltpu.roll(v, shift=SH_UP, axis=0) * h_lo_f
        dn = pltpu.roll(v, shift=SH_DN, axis=0) * h_hi_f
        col = up + dn + v
        lf = pltpu.roll(col, shift=SH_L, axis=1) * w_lo_f
        rt = pltpu.roll(col, shift=SH_R, axis=1) * w_hi_f
        return (lf + rt + col) * invc_ref[...]

    def depthwise_3x3(v, k_ref):
        # Conv2d(C, C, 3, 1, padding=1, groups=C, bias=False).
        # k_ref: (9, NWC) host-packed per-lane weights with the w-edge validity folded in,
        # so only the sublane (h) mask is applied at runtime.
        kw = [k_ref[t:t + 1, :] for t in range(9)]               # loaded once per conv
        rows = (pltpu.roll(v, shift=SH_UP, axis=0) * h_lo_f,     # x[h-1, :] (masked)
                v,                                                # x[h,   :]
                pltpu.roll(v, shift=SH_DN, axis=0) * h_hi_f)     # x[h+1, :] (masked)
        acc = None
        for i, r in enumerate(rows):                              # i = dh+1
            taps = (pltpu.roll(r, shift=SH_L, axis=1), r, pltpu.roll(r, shift=SH_R, axis=1))
            for j, t in enumerate(taps):                          # j = dw+1
                term = t * kw[i * 3 + j]
                acc = term if acc is None else acc + term
        return acc

    def pointwise(v, p_ref):
        # Conv2d(C, C, 1, bias=False) via 2*(C-1) lane rolls with host-precomputed per-lane
        # coefficient vectors (zero where the roll crosses a packed (n, w) group boundary).
        rows = [p_ref[d:d + 1, :] for d in range(2 * C - 1)]
        acc = v * rows[C - 1]                                     # delta = 0 (diagonal)
        for d in range(2 * C - 1):
            delta = d - (C - 1)
            if delta == 0:
                continue
            acc = acc + pltpu.roll(v, shift=(-delta) % NWC, axis=1) * rows[d]
        return acc

    def sep_conv_3x3(v, out_w):
        h1 = jnp.maximum(v, 0.0)
        h1 = batch_norm(pointwise(depthwise_3x3(h1, dw1_ref), pwc1_ref), 1.0)
        h1 = jnp.maximum(h1, 0.0)
        return batch_norm(pointwise(depthwise_3x3(h1, dw2_ref), pwc2_ref), out_w)

    # op 0 'none' contributes exactly zero; op 3 'skip_connect' (stride==1 -> identity) is
    # folded into the accumulator init. Branch results accumulate in VMEM scratch and o_ref
    # is written exactly once at the end.
    acc_ref[...] = w_ref[3] * x

    # NOTE: the two pool branches could share their shifted copies of x, but that would force
    # unconditional execution of both; keep them gated so inactive ops really are skipped.
    @pl.when(w_ref[1] > 0.0)       # max_pool_3x3 + BN
    def _():
        acc_ref[...] += batch_norm(max_pool_3x3(x), w_ref[1])

    @pl.when(w_ref[2] > 0.0)       # avg_pool_3x3 + BN
    def _():
        acc_ref[...] += batch_norm(avg_pool_3x3(x), w_ref[2])

    @pl.when(w_ref[4] > 0.0)       # sep_conv_3x3
    def _():
        acc_ref[...] += sep_conv_3x3(x, w_ref[4])

    o_ref[...] = acc_ref[...]


def effective_weights(weights, threshold=WEIGHT_THRESHOLD, top_k=TOP_K):
    """Reproduces FastMixedOp._forward_training weight selection:
    threshold filter -> (argmax fallback if empty) -> top-k among active -> renormalize.
    Returns a length-num_ops vector; inactive ops get weight 0.
    Note: under exact ties at the k-th value this keeps >k ops (torch.topk keeps exactly k)."""
    num_ops = weights.shape[0]
    top_k = min(top_k, num_ops)
    thr_mask = weights > threshold
    n_active = jnp.sum(thr_mask)
    argmax_mask = jnp.arange(num_ops) == jnp.argmax(weights)
    mask = jnp.where(n_active == 0, argmax_mask, thr_mask)
    masked_w = jnp.where(mask, weights, -jnp.inf)
    kth = jnp.sort(masked_w)[num_ops - top_k]          # k-th largest among active
    mask = jnp.where(n_active > top_k, mask & (masked_w >= kth), mask)
    w_act = jnp.where(mask, weights, 0.0)
    return (w_act / (jnp.sum(w_act) + 1e-8)).astype(jnp.float32)


def _build_constants(N, H, W, C, dw1, pw1, dw2, pw2):
    """Host-side (numpy) per-shape constants; built once and cached. O(NWC*C) footprint."""
    NWC = N * W * C
    lane = np.arange(NWC)
    c_of = lane % C
    w_of = (lane // C) % W
    widx = w_of.astype(np.int32).reshape(1, NWC)

    # avg-pool reciprocal valid-tap count (count_include_pad=False)
    hh = np.arange(H)
    ww = np.arange(W)
    rh = np.minimum(hh + 1, H - 1) - np.maximum(hh - 1, 0) + 1
    rw = np.minimum(ww + 1, W - 1) - np.maximum(ww - 1, 0) + 1
    invc = 1.0 / (rh[:, None] * rw[None, :]).astype(np.float32)        # (H, W)
    invc = np.tile(np.repeat(invc, C, axis=1), (1, N)).astype(np.float32)  # (H, NWC)

    # depthwise kernels: (9, NWC) with w-edge validity folded into the per-lane weights
    def pack_dw(k):
        k = np.asarray(k)
        out = np.zeros((9, NWC), np.float32)
        for dh in (-1, 0, 1):
            for dw in (-1, 0, 1):
                t = (dh + 1) * 3 + (dw + 1)
                w_valid = ((w_of + dw >= 0) & (w_of + dw <= W - 1)).astype(np.float32)
                out[t] = k[dh + 1, dw + 1, c_of] * w_valid
        return out

    # pointwise 1x1 conv as lane-roll coefficients: (2C-1, NWC); row d <-> delta = d-(C-1)
    def pack_pw(pw):
        pw = np.asarray(pw)
        out = np.zeros((2 * C - 1, NWC), np.float32)
        for d in range(2 * C - 1):
            delta = d - (C - 1)
            src = c_of + delta
            valid = (src >= 0) & (src < C)
            out[d, valid] = pw[src[valid], c_of[valid]]
        return out

    # BatchNorm reduce / broadcast matrices (channel dim padded to a multiple of 8)
    CP = max(8, ((C + 7) // 8) * 8)
    bnr = np.zeros((NWC, CP), np.float32)
    bnr[lane, c_of] = 1.0 / float(N * H * W)        # 1/(N*H*W) folded into the reduce
    bnb = np.zeros((CP, NWC), np.float32)
    bnb[c_of, lane] = 1.0

    arrays = (widx, invc, pack_dw(dw1), pack_pw(pw1), pack_dw(dw2), pack_pw(pw2), bnr, bnb)
    return tuple(jnp.asarray(a) for a in arrays)


def _make_forward(N, H, W, C, threshold, top_k):
    """Build the jitted pack -> pallas_call -> unpack forward for one input shape."""
    NWC = N * W * C
    kernel = functools.partial(_fast_mixed_op_kernel, N=N, H=H, W=W, C=C)
    vspec = pl.BlockSpec(memory_space=pltpu.MemorySpace.VMEM)
    sspec = pl.BlockSpec(memory_space=pltpu.MemorySpace.SMEM)
    call = pl.pallas_call(
        kernel,
        out_shape=jax.ShapeDtypeStruct((H, NWC), jnp.float32),
        in_specs=[sspec] + [vspec] * 9,
        out_specs=vspec,
        scratch_shapes=[pltpu.VMEM((H, NWC), jnp.float32)],   # weighted-sum accumulator
        # Explicit limit: v5e's default scoped VMEM is only 16 MiB; actual use here is tiny.
        compiler_params=pltpu.CompilerParams(vmem_limit_bytes=32 * 1024 * 1024),
    )

    @jax.jit
    def fwd(x_nchw, weights, widx, invc, dw1p, pwc1, dw2p, pwc2, bnr, bnb):
        w_eff = effective_weights(weights, threshold, top_k)
        # pack: x_p[h, n*W*C + w*C + c] = x[n, c, h, w]
        # TODO(synk): these transposes disappear if the surrounding model stays packed end-to-end.
        x_p = jnp.transpose(x_nchw.astype(jnp.float32), (2, 0, 3, 1)).reshape(H, NWC)
        out = call(w_eff, x_p, widx, invc, dw1p, pwc1, dw2p, pwc2, bnr, bnb)
        return jnp.transpose(out.reshape(H, N, W, C), (1, 3, 0, 2))

    return fwd


class FastMixedOpPallas:
    """Pallas/TPU equivalent of FastMixedOp(C, stride=1) forward (training path)."""

    def __init__(self, C, stride=1, weight_threshold=WEIGHT_THRESHOLD, top_k=TOP_K, seed=0):
        assert stride == 1  # TODO(synk): stride=2 variants (FactorizedReduce, strided pools/convs) not implemented.
        self.C = C
        self.stride = stride
        self.weight_threshold = weight_threshold
        self.top_k = min(top_k, len(PRIMITIVES))
        # Deterministic synthetic parameters for sep_conv_3x3 (SepConv has no bias; BNs are affine=False).
        k1, k2, k3, k4 = jax.random.split(jax.random.PRNGKey(seed), 4)
        s_dw = 1.0 / jnp.sqrt(9.0)
        s_pw = 1.0 / jnp.sqrt(float(C))
        self.dw1 = (jax.random.normal(k1, (3, 3, C)) * s_dw).astype(jnp.float32)
        self.pw1 = (jax.random.normal(k2, (C, C)) * s_pw).astype(jnp.float32)
        self.dw2 = (jax.random.normal(k3, (3, 3, C)) * s_dw).astype(jnp.float32)
        self.pw2 = (jax.random.normal(k4, (C, C)) * s_pw).astype(jnp.float32)
        self._shape_cache = {}   # (N, H, W) -> (constants tuple, jitted forward)
        # TODO(synk): eval-mode path (training=False) needs BatchNorm running stats; only training path implemented.
        # TODO(synk): host-side result cache / cache-hit statistics have no numeric effect; omitted.

    def _get(self, N, H, W):
        key = (N, H, W)
        if key not in self._shape_cache:
            consts = _build_constants(N, H, W, self.C, self.dw1, self.pw1, self.dw2, self.pw2)
            fwd = _make_forward(N, H, W, self.C, self.weight_threshold, self.top_k)
            self._shape_cache[key] = (consts, fwd)
        return self._shape_cache[key]

    def __call__(self, x_nchw, weights):
        N, C, H, W = x_nchw.shape
        assert C == self.C
        NWC = N * W * C
        # Packing constraints of this kernel (demo shape satisfies both).
        # TODO(synk): pad H/NWC and add an H-tiled grid (+/-1 halo, parallel over v7x's 2 TCs,
        #             two-pass BN stats) for large shapes; whole-array residency is fine here.
        assert H % 8 == 0 and NWC % 128 == 0
        consts, fwd = self._get(N, H, W)
        return fwd(x_nchw, weights, *consts)


# --------------------------- pure-JAX reference -----------------------------
def _ref_forward(x_nchw, weights, dw1, pw1, dw2, pw2,
                 threshold=WEIGHT_THRESHOLD, top_k=TOP_K):
    x = jnp.transpose(x_nchw, (0, 2, 3, 1)).astype(jnp.float32)
    N, H, W, C = x.shape
    w_eff = effective_weights(weights, threshold, top_k)

    def pad2(v, fill):
        return jnp.pad(v, ((0, 0), (1, 1), (1, 1), (0, 0)), constant_values=fill)

    def windows(vp):
        return [vp[:, dh:dh + H, dw:dw + W, :] for dh in range(3) for dw in range(3)]

    def bn(v):
        m = jnp.mean(v, axis=(0, 1, 2), keepdims=True)
        var = jnp.mean((v - m) ** 2, axis=(0, 1, 2), keepdims=True)
        return (v - m) * lax.rsqrt(var + BN_EPS)

    def maxpool(v):
        return functools.reduce(jnp.maximum, windows(pad2(v, _NEG)))

    def avgpool(v):
        s = sum(windows(pad2(v, 0.0)))
        cnt = sum(windows(pad2(jnp.ones_like(v), 0.0)))
        return s / cnt

    def dconv(v, k):
        ws = windows(pad2(v, 0.0))
        out = jnp.zeros_like(v)
        i = 0
        for dh in range(3):
            for dw in range(3):
                out = out + ws[i] * k[dh, dw][None, None, None, :]
                i += 1
        return out

    def pconv(v, pw):
        return jnp.einsum("nhwc,cd->nhwd", v, pw)

    def sepconv(v):
        h = jax.nn.relu(v)
        h = bn(pconv(dconv(h, dw1), pw1))
        h = jax.nn.relu(h)
        h = bn(pconv(dconv(h, dw2), pw2))
        return h

    outs = [jnp.zeros_like(x), bn(maxpool(x)), bn(avgpool(x)), x, sepconv(x)]
    res = sum(w_eff[i] * outs[i] for i in range(len(outs)))
    return jnp.transpose(res, (0, 3, 1, 2))


if __name__ == "__main__":
    key = jax.random.PRNGKey(0)
    kx, kw = jax.random.split(key)
    N, C, H, W = 2, 4, 16, 16
    x = jax.random.normal(kx, (N, C, H, W), dtype=jnp.float32)        # NCHW like PyTorch
    alpha = jax.random.normal(kw, (len(PRIMITIVES),), dtype=jnp.float32)
    weights = jax.nn.softmax(alpha)                                   # architecture weights [num_ops]

    op = FastMixedOpPallas(C=C, stride=1)
    out = jax.block_until_ready(op(x, weights))

    ref = _ref_forward(x, weights, op.dw1, op.pw1, op.dw2, op.pw2)
    assert out.shape == (N, C, H, W)
    assert bool(jnp.all(jnp.isfinite(out)))
    err = float(jnp.max(jnp.abs(out - ref)))
    assert jnp.allclose(out, ref, rtol=1e-2, atol=1e-2), f"max abs err = {err}"
    print("KERNEL_OK")
</pallas_src>

<mosaic_0001>
module attributes {stable_mosaic.version = 11 : i64} {
  func.func @_fast_mixed_op_kernel(%arg0: memref<5xf32, #tpu.memory_space<smem>>, %arg1: memref<16x128xf32, #tpu.memory_space<vmem>>, %arg2: memref<1x128xi32, #tpu.memory_space<vmem>>, %arg3: memref<16x128xf32, #tpu.memory_space<vmem>>, %arg4: memref<9x128xf32, #tpu.memory_space<vmem>>, %arg5: memref<7x128xf32, #tpu.memory_space<vmem>>, %arg6: memref<9x128xf32, #tpu.memory_space<vmem>>, %arg7: memref<7x128xf32, #tpu.memory_space<vmem>>, %arg8: memref<128x8xf32, #tpu.memory_space<vmem>>, %arg9: memref<8x128xf32, #tpu.memory_space<vmem>>, %arg10: memref<16x128xf32, #tpu.memory_space<vmem>>, %arg11: memref<16x128xf32, #tpu.memory_space<vmem>>) attributes {dimension_semantics = [], scalar_prefetch = 0 : i64, scratch_operands = 1 : i64, tpu.core_type = #tpu.core_type<tc>} {
    %c0 = arith.constant 0 : index
    %c0_0 = arith.constant 0 : index
    %0 = vector.load %arg1[%c0, %c0_0] : memref<16x128xf32, #tpu.memory_space<vmem>>, vector<16x128xf32>
    %1 = tpu.iota {dimensions = array<i32: 0>} : vector<16x1xi32>
    %c0_i32 = arith.constant 0 : i32
    %2 = vector.broadcast %c0_i32 : i32 to vector<16x1xi32>
    %3 = arith.cmpi sgt, %1, %2 : vector<16x1xi32>
    %c15_i32 = arith.constant 15 : i32
    %4 = vector.broadcast %c15_i32 : i32 to vector<16x1xi32>
    %5 = arith.cmpi slt, %1, %4 : vector<16x1xi32>
    %6 = arith.extui %3 : vector<16x1xi1> to vector<16x1xi32>
    %7 = arith.sitofp %6 : vector<16x1xi32> to vector<16x1xf32>
    %8 = arith.extui %5 : vector<16x1xi1> to vector<16x1xi32>
    %9 = arith.sitofp %8 : vector<16x1xi32> to vector<16x1xf32>
    %c0_1 = arith.constant 0 : index
    %c0_2 = arith.constant 0 : index
    %10 = vector.load %arg2[%c0_1, %c0_2] : memref<1x128xi32, #tpu.memory_space<vmem>>, vector<1x128xi32>
    %c0_i32_3 = arith.constant 0 : i32
    %11 = vector.broadcast %c0_i32_3 : i32 to vector<1x128xi32>
    %12 = arith.cmpi sgt, %10, %11 : vector<1x128xi32>
    %c15_i32_4 = arith.constant 15 : i32
    %13 = vector.broadcast %c15_i32_4 : i32 to vector<1x128xi32>
    %14 = arith.cmpi slt, %10, %13 : vector<1x128xi32>
    %15 = arith.extui %12 : vector<1x128xi1> to vector<1x128xi32>
    %16 = arith.sitofp %15 : vector<1x128xi32> to vector<1x128xf32>
    %17 = arith.extui %14 : vector<1x128xi1> to vector<1x128xi32>
    %18 = arith.sitofp %17 : vector<1x128xi32> to vector<1x128xf32>
    %c3 = arith.constant 3 : index
    %19 = memref.load %arg0[%c3] : memref<5xf32, #tpu.memory_space<smem>>
    %20 = vector.broadcast %19 : f32 to vector<16x128xf32>
    %21 = arith.mulf %20, %0 : vector<16x128xf32>
    %c0_5 = arith.constant 0 : index
    %c0_6 = arith.constant 0 : index
    %22 = vector.load %arg11[%c0_5, %c0_6] : memref<16x128xf32, #tpu.memory_space<vmem>>, vector<16x128xf32>
    tpu.vector_store %arg11[%c0_5, %c0_6], %21 {strides = array<i32>} : memref<16x128xf32, #tpu.memory_space<vmem>>, vector<16x128xf32>,
    %c1 = arith.constant 1 : index
    %23 = memref.load %arg0[%c1] : memref<5xf32, #tpu.memory_space<smem>>
    %cst = arith.constant 0.000000e+00 : f32
    %24 = arith.cmpf ogt, %23, %cst : f32
    %25 = arith.extui %24 : i1 to i32
    %c0_i32_7 = arith.constant 0 : i32
    %26 = arith.cmpi ne, %25, %c0_i32_7 : i32
    scf.if %26 {
      %c0_16 = arith.constant 0 : index
      %c0_17 = arith.constant 0 : index
      %37 = vector.load %arg11[%c0_16, %c0_17] : memref<16x128xf32, #tpu.memory_space<vmem>>, vector<16x128xf32>
      %c1_i32 = arith.constant 1 : i32
      %38 = tpu.dynamic_rotate %0 by %c1_i32 dim 0 : vector<16x128xf32>, i32 -> vector<16x128xf32>
      %cst_18 = arith.constant -1.000000e+30 : f32
      %39 = vector.shape_cast %3 : vector<16x1xi1> to vector<16x1xi1>
      %40 = vector.broadcast %39 : vector<16x1xi1> to vector<16x128xi1>
      %41 = vector.broadcast %cst_18 : f32 to vector<16x128xf32>
      %42 = arith.select %40, %38, %41 : vector<16x128xi1>, vector<16x128xf32>
      %c15_i32_19 = arith.constant 15 : i32
      %43 = tpu.dynamic_rotate %0 by %c15_i32_19 dim 0 : vector<16x128xf32>, i32 -> vector<16x128xf32>
      %cst_20 = arith.constant -1.000000e+30 : f32
      %44 = vector.shape_cast %5 : vector<16x1xi1> to vector<16x1xi1>
      %45 = vector.broadcast %44 : vector<16x1xi1> to vector<16x128xi1>
      %46 = vector.broadcast %cst_20 : f32 to vector<16x128xf32>
      %47 = arith.select %45, %43, %46 : vector<16x128xi1>, vector<16x128xf32>
      %48 = arith.maximumf %42, %47 : vector<16x128xf32>
      %49 = arith.maximumf %48, %0 : vector<16x128xf32>
      %c4_i32 = arith.constant 4 : i32
      %50 = tpu.dynamic_rotate %49 by %c4_i32 dim 1 : vector<16x128xf32>, i32 -> vector<16x128xf32>
      %cst_21 = arith.constant -1.000000e+30 : f32
      %51 = vector.shape_cast %12 : vector<1x128xi1> to vector<1x128xi1>
      %52 = vector.broadcast %51 : vector<1x128xi1> to vector<16x128xi1>
      %53 = vector.broadcast %cst_21 : f32 to vector<16x128xf32>
      %54 = arith.select %52, %50, %53 : vector<16x128xi1>, vector<16x128xf32>
      %c124_i32 = arith.constant 124 : i32
      %55 = tpu.dynamic_rotate %49 by %c124_i32 dim 1 : vector<16x128xf32>, i32 -> vector<16x128xf32>
      %cst_22 = arith.constant -1.000000e+30 : f32
      %56 = vector.shape_cast %14 : vector<1x128xi1> to vector<1x128xi1>
      %57 = vector.broadcast %56 : vector<1x128xi1> to vector<16x128xi1>
      %58 = vector.broadcast %cst_22 : f32 to vector<16x128xf32>
      %59 = arith.select %57, %55, %58 : vector<16x128xi1>, vector<16x128xf32>
      %60 = arith.maximumf %54, %59 : vector<16x128xf32>
      %61 = arith.maximumf %60, %49 : vector<16x128xf32>
      %c1_23 = arith.constant 1 : index
      %62 = memref.load %arg0[%c1_23] : memref<5xf32, #tpu.memory_space<smem>>
      %cst_24 = arith.constant dense<0.000000e+00> : vector<128xf32>
      %63 = vector.multi_reduction <add>, %61, %cst_24 [0] : vector<16x128xf32> to vector<128xf32>
      %64 = vector.shape_cast %63 : vector<128xf32> to vector<1x128xf32>
      %65 = arith.mulf %61, %61 : vector<16x128xf32>
      %cst_25 = arith.constant dense<0.000000e+00> : vector<128xf32>
      %66 = vector.multi_reduction <add>, %65, %cst_25 [0] : vector<16x128xf32> to vector<128xf32>
      %67 = vector.shape_cast %66 : vector<128xf32> to vector<1x128xf32>
      %68 = tpu.concatenate %64, %67 in 0 : vector<1x128xf32>, vector<1x128xf32> -> vector<2x128xf32>
      %c0_26 = arith.constant 0 : index
      %c0_27 = arith.constant 0 : index
      %69 = vector.load %arg8[%c0_26, %c0_27] : memref<128x8xf32, #tpu.memory_space<vmem>>, vector<128x8xf32>
      %cst_28 = arith.constant dense<0.000000e+00> : vector<2x8xf32>
      %70 = tpu.matmul %68, %69, %cst_28 {dimension_numbers = #tpu.dot_dimension_numbers<[1], [0], [0], [1], [0, 0, 1, 1], [], []>} : vector<2x128xf32>, vector<128x8xf32>, vector<2x8xf32> -> vector<2x8xf32>
      %c0_29 = arith.constant 0 : index
      %c0_30 = arith.constant 0 : index
      %71 = vector.load %arg9[%c0_29, %c0_30] : memref<8x128xf32, #tpu.memory_space<vmem>>, vector<8x128xf32>
      %cst_31 = arith.constant dense<0.000000e+00> : vector<2x128xf32>
      %72 = tpu.matmul %70, %71, %cst_31 {dimension_numbers = #tpu.dot_dimension_numbers<[1], [0], [0], [1], [0, 0, 1, 1], [], []>} : vector<2x8xf32>, vector<8x128xf32>, vector<2x128xf32> -> vector<2x128xf32>
      %73 = vector.extract_strided_slice %72 {offsets = [0, 0], sizes = [1, 128], strides = [1, 1]} : vector<2x128xf32> to vector<1x128xf32>
      %74 = vector.extract_strided_slice %72 {offsets = [1, 0], sizes = [1, 128], strides = [1, 1]} : vector<2x128xf32> to vector<1x128xf32>
      %75 = arith.mulf %73, %73 : vector<1x128xf32>
      %76 = arith.subf %74, %75 : vector<1x128xf32>
      %cst_32 = arith.constant 0.000000e+00 : f32
      %77 = vector.broadcast %cst_32 : f32 to vector<1x128xf32>
      %78 = arith.maximumf %76, %77 : vector<1x128xf32>
      %79 = vector.broadcast %73 : vector<1x128xf32> to vector<16x128xf32>
      %80 = arith.subf %61, %79 : vector<16x128xf32>
      %cst_33 = arith.constant 9.99999974E-6 : f32
      %81 = vector.broadcast %cst_33 : f32 to vector<1x128xf32>
      %82 = arith.addf %78, %81 : vector<1x128xf32>
      %83 = math.rsqrt %82 : vector<1x128xf32>
      %84 = vector.broadcast %62 : f32 to vector<1x128xf32>
      %85 = arith.mulf %84, %83 : vector<1x128xf32>
      %86 = vector.broadcast %85 : vector<1x128xf32> to vector<16x128xf32>
      %87 = arith.mulf %80, %86 : vector<16x128xf32>
      %88 = arith.addf %37, %87 : vector<16x128xf32>
      %c0_34 = arith.constant 0 : index
      %c0_35 = arith.constant 0 : index
      %89 = vector.load %arg11[%c0_34, %c0_35] : memref<16x128xf32, #tpu.memory_space<vmem>>, vector<16x128xf32>
      tpu.vector_store %arg11[%c0_34, %c0_35], %88 {strides = array<i32>} : memref<16x128xf32, #tpu.memory_space<vmem>>, vector<16x128xf32>,
    } else {
    }
    %c2 = arith.constant 2 : index
    %27 = memref.load %arg0[%c2] : memref<5xf32, #tpu.memory_space<smem>>
    %cst_8 = arith.constant 0.000000e+00 : f32
    %28 = arith.cmpf ogt, %27, %cst_8 : f32
    %29 = arith.extui %28 : i1 to i32
    %c0_i32_9 = arith.constant 0 : i32
    %30 = arith.cmpi ne, %29, %c0_i32_9 : i32
    scf.if %30 {
      %c0_16 = arith.constant 0 : index
      %c0_17 = arith.constant 0 : index
      %37 = vector.load %arg11[%c0_16, %c0_17] : memref<16x128xf32, #tpu.memory_space<vmem>>, vector<16x128xf32>
      %c1_i32 = arith.constant 1 : i32
      %38 = tpu.dynamic_rotate %0 by %c1_i32 dim 0 : vector<16x128xf32>, i32 -> vector<16x128xf32>
      %39 = vector.broadcast %7 : vector<16x1xf32> to vector<16x128xf32>
      %40 = arith.mulf %38, %39 : vector<16x128xf32>
      %c15_i32_18 = arith.constant 15 : i32
      %41 = tpu.dynamic_rotate %0 by %c15_i32_18 dim 0 : vector<16x128xf32>, i32 -> vector<16x128xf32>
      %42 = vector.broadcast %9 : vector<16x1xf32> to vector<16x128xf32>
      %43 = arith.mulf %41, %42 : vector<16x128xf32>
      %44 = arith.addf %40, %43 : vector<16x128xf32>
      %45 = arith.addf %44, %0 : vector<16x128xf32>
      %c4_i32 = arith.constant 4 : i32
      %46 = tpu.dynamic_rotate %45 by %c4_i32 dim 1 : vector<16x128xf32>, i32 -> vector<16x128xf32>
      %47 = vector.broadcast %16 : vector<1x128xf32> to vector<16x128xf32>
      %48 = arith.mulf %46, %47 : vector<16x128xf32>
      %c124_i32 = arith.constant 124 : i32
      %49 = tpu.dynamic_rotate %45 by %c124_i32 dim 1 : vector<16x128xf32>, i32 -> vector<16x128xf32>
      %50 = vector.broadcast %18 : vector<1x128xf32> to vector<16x128xf32>
      %51 = arith.mulf %49, %50 : vector<16x128xf32>
      %52 = arith.addf %48, %51 : vector<16x128xf32>
      %53 = arith.addf %52, %45 : vector<16x128xf32>
      %c0_19 = arith.constant 0 : index
      %c0_20 = arith.constant 0 : index
      %54 = vector.load %arg3[%c0_19, %c0_20] : memref<16x128xf32, #tpu.memory_space<vmem>>, vector<16x128xf32>
      %55 = arith.mulf %53, %54 : vector<16x128xf32>
      %c2_21 = arith.constant 2 : index
      %56 = memref.load %arg0[%c2_21] : memref<5xf32, #tpu.memory_space<smem>>
      %cst_22 = arith.constant dense<0.000000e+00> : vector<128xf32>
      %57 = vector.multi_reduction <add>, %55, %cst_22 [0] : vector<16x128xf32> to vector<128xf32>
      %58 = vector.shape_cast %57 : vector<128xf32> to vector<1x128xf32>
      %59 = arith.mulf %55, %55 : vector<16x128xf32>
      %cst_23 = arith.constant dense<0.000000e+00> : vector<128xf32>
      %60 = vector.multi_reduction <add>, %59, %cst_23 [0] : vector<16x128xf32> to vector<128xf32>
      %61 = vector.shape_cast %60 : vector<128xf32> to vector<1x128xf32>
      %62 = tpu.concatenate %58, %61 in 0 : vector<1x128xf32>, vector<1x128xf32> -> vector<2x128xf32>
      %c0_24 = arith.constant 0 : index
      %c0_25 = arith.constant 0 : index
      %63 = vector.load %arg8[%c0_24, %c0_25] : memref<128x8xf32, #tpu.memory_space<vmem>>, vector<128x8xf32>
      %cst_26 = arith.constant dense<0.000000e+00> : vector<2x8xf32>
      %64 = tpu.matmul %62, %63, %cst_26 {dimension_numbers = #tpu.dot_dimension_numbers<[1], [0], [0], [1], [0, 0, 1, 1], [], []>} : vector<2x128xf32>, vector<128x8xf32>, vector<2x8xf32> -> vector<2x8xf32>
      %c0_27 = arith.constant 0 : index
      %c0_28 = arith.constant 0 : index
      %65 = vector.load %arg9[%c0_27, %c0_28] : memref<8x128xf32, #tpu.memory_space<vmem>>, vector<8x128xf32>
      %cst_29 = arith.constant dense<0.000000e+00> : vector<2x128xf32>
      %66 = tpu.matmul %64, %65, %cst_29 {dimension_numbers = #tpu.dot_dimension_numbers<[1], [0], [0], [1], [0, 0, 1, 1], [], []>} : vector<2x8xf32>, vector<8x128xf32>, vector<2x128xf32> -> vector<2x128xf32>
      %67 = vector.extract_strided_slice %66 {offsets = [0, 0], sizes = [1, 128], strides = [1, 1]} : vector<2x128xf32> to vector<1x128xf32>
      %68 = vector.extract_strided_slice %66 {offsets = [1, 0], sizes = [1, 128], strides = [1, 1]} : vector<2x128xf32> to vector<1x128xf32>
      %69 = arith.mulf %67, %67 : vector<1x128xf32>
      %70 = arith.subf %68, %69 : vector<1x128xf32>
      %cst_30 = arith.constant 0.000000e+00 : f32
      %71 = vector.broadcast %cst_30 : f32 to vector<1x128xf32>
      %72 = arith.maximumf %70, %71 : vector<1x128xf32>
      %73 = vector.broadcast %67 : vector<1x128xf32> to vector<16x128xf32>
      %74 = arith.subf %55, %73 : vector<16x128xf32>
      %cst_31 = arith.constant 9.99999974E-6 : f32
      %75 = vector.broadcast %cst_31 : f32 to vector<1x128xf32>
      %76 = arith.addf %72, %75 : vector<1x128xf32>
      %77 = math.rsqrt %76 : vector<1x128xf32>
      %78 = vector.broadcast %56 : f32 to vector<1x128xf32>
      %79 = arith.mulf %78, %77 : vector<1x128xf32>
      %80 = vector.broadcast %79 : vector<1x128xf32> to vector<16x128xf32>
      %81 = arith.mulf %74, %80 : vector<16x128xf32>
      %82 = arith.addf %37, %81 : vector<16x128xf32>
      %c0_32 = arith.constant 0 : index
      %c0_33 = arith.constant 0 : index
      %83 = vector.load %arg11[%c0_32, %c0_33] : memref<16x128xf32, #tpu.memory_space<vmem>>, vector<16x128xf32>
      tpu.vector_store %arg11[%c0_32, %c0_33], %82 {strides = array<i32>} : memref<16x128xf32, #tpu.memory_space<vmem>>, vector<16x128xf32>,
    } else {
    }
    %c4 = arith.constant 4 : index
    %31 = memref.load %arg0[%c4] : memref<5xf32, #tpu.memory_space<smem>>
    %cst_10 = arith.constant 0.000000e+00 : f32
    %32 = arith.cmpf ogt, %31, %cst_10 : f32
    %33 = arith.extui %32 : i1 to i32
    %c0_i32_11 = arith.constant 0 : i32
    %34 = arith.cmpi ne, %33, %c0_i32_11 : i32
    scf.if %34 {
      %c0_16 = arith.constant 0 : index
      %c0_17 = arith.constant 0 : index
      %37 = vector.load %arg11[%c0_16, %c0_17] : memref<16x128xf32, #tpu.memory_space<vmem>>, vector<16x128xf32>
      %c4_18 = arith.constant 4 : index
      %38 = memref.load %arg0[%c4_18] : memref<5xf32, #tpu.memory_space<smem>>
      %cst_19 = arith.constant 0.000000e+00 : f32
      %39 = vector.broadcast %cst_19 : f32 to vector<16x128xf32>
      %40 = arith.maximumf %0, %39 : vector<16x128xf32>
      %c0_20 = arith.constant 0 : index
      %c0_21 = arith.constant 0 : index
      %41 = vector.load %arg4[%c0_20, %c0_21] : memref<9x128xf32, #tpu.memory_space<vmem>>, vector<1x128xf32>
      %c1_22 = arith.constant 1 : index
      %c0_23 = arith.constant 0 : index
      %42 = vector.load %arg4[%c1_22, %c0_23] : memref<9x128xf32, #tpu.memory_space<vmem>>, vector<1x128xf32>
      %c2_24 = arith.constant 2 : index
      %c0_25 = arith.constant 0 : index
      %43 = vector.load %arg4[%c2_24, %c0_25] : memref<9x128xf32, #tpu.memory_space<vmem>>, vector<1x128xf32>
      %c3_26 = arith.constant 3 : index
      %c0_27 = arith.constant 0 : index
      %44 = vector.load %arg4[%c3_26, %c0_27] : memref<9x128xf32, #tpu.memory_space<vmem>>, vector<1x128xf32>
      %c4_28 = arith.constant 4 : index
      %c0_29 = arith.constant 0 : index
      %45 = vector.load %arg4[%c4_28, %c0_29] : memref<9x128xf32, #tpu.memory_space<vmem>>, vector<1x128xf32>
      %c5 = arith.constant 5 : index
      %c0_30 = arith.constant 0 : index
      %46 = vector.load %arg4[%c5, %c0_30] : memref<9x128xf32, #tpu.memory_space<vmem>>, vector<1x128xf32>
      %c6 = arith.constant 6 : index
      %c0_31 = arith.constant 0 : index
      %47 = vector.load %arg4[%c6, %c0_31] : memref<9x128xf32, #tpu.memory_space<vmem>>, vector<1x128xf32>
      %c7 = arith.constant 7 : index
      %c0_32 = arith.constant 0 : index
      %48 = vector.load %arg4[%c7, %c0_32] : memref<9x128xf32, #tpu.memory_space<vmem>>, vector<1x128xf32>
      %c8 = arith.constant 8 : index
      %c0_33 = arith.constant 0 : index
      %49 = vector.load %arg4[%c8, %c0_33] : memref<9x128xf32, #tpu.memory_space<vmem>>, vector<1x128xf32>
      %c1_i32 = arith.constant 1 : i32
      %50 = tpu.dynamic_rotate %40 by %c1_i32 dim 0 : vector<16x128xf32>, i32 -> vector<16x128xf32>
      %51 = vector.broadcast %7 : vector<16x1xf32> to vector<16x128xf32>
      %52 = arith.mulf %50, %51 : vector<16x128xf32>
      %c15_i32_34 = arith.constant 15 : i32
      %53 = tpu.dynamic_rotate %40 by %c15_i32_34 dim 0 : vector<16x128xf32>, i32 -> vector<16x128xf32>
      %54 = vector.broadcast %9 : vector<16x1xf32> to vector<16x128xf32>
      %55 = arith.mulf %53, %54 : vector<16x128xf32>
      %c4_i32 = arith.constant 4 : i32
      %56 = tpu.dynamic_rotate %52 by %c4_i32 dim 1 : vector<16x128xf32>, i32 -> vector<16x128xf32>
      %c124_i32 = arith.constant 124 : i32
      %57 = tpu.dynamic_rotate %52 by %c124_i32 dim 1 : vector<16x128xf32>, i32 -> vector<16x128xf32>
      %58 = vector.broadcast %41 : vector<1x128xf32> to vector<16x128xf32>
      %59 = arith.mulf %56, %58 : vector<16x128xf32>
      %60 = vector.broadcast %42 : vector<1x128xf32> to vector<16x128xf32>
      %61 = arith.mulf %52, %60 : vector<16x128xf32>
      %62 = arith.addf %59, %61 : vector<16x128xf32>
      %63 = vector.broadcast %43 : vector<1x128xf32> to vector<16x128xf32>
      %64 = arith.mulf %57, %63 : vector<16x128xf32>
      %65 = arith.addf %62, %64 : vector<16x128xf32>
      %c4_i32_35 = arith.constant 4 : i32
      %66 = tpu.dynamic_rotate %40 by %c4_i32_35 dim 1 : vector<16x128xf32>, i32 -> vector<16x128xf32>
      %c124_i32_36 = arith.constant 124 : i32
      %67 = tpu.dynamic_rotate %40 by %c124_i32_36 dim 1 : vector<16x128xf32>, i32 -> vector<16x128xf32>
      %68 = vector.broadcast %44 : vector<1x128xf32> to vector<16x128xf32>
      %69 = arith.mulf %66, %68 : vector<16x128xf32>
      %70 = arith.addf %65, %69 : vector<16x128xf32>
      %71 = vector.broadcast %45 : vector<1x128xf32> to vector<16x128xf32>
      %72 = arith.mulf %40, %71 : vector<16x128xf32>
      %73 = arith.addf %70, %72 : vector<16x128xf32>
      %74 = vector.broadcast %46 : vector<1x128xf32> to vector<16x128xf32>
      %75 = arith.mulf %67, %74 : vector<16x128xf32>
      %76 = arith.addf %73, %75 : vector<16x128xf32>
      %c4_i32_37 = arith.constant 4 : i32
      %77 = tpu.dynamic_rotate %55 by %c4_i32_37 dim 1 : vector<16x128xf32>, i32 -> vector<16x128xf32>
      %c124_i32_38 = arith.constant 124 : i32
      %78 = tpu.dynamic_rotate %55 by %c124_i32_38 dim 1 : vector<16x128xf32>, i32 -> vector<16x128xf32>
      %79 = vector.broadcast %47 : vector<1x128xf32> to vector<16x128xf32>
      %80 = arith.mulf %77, %79 : vector<16x128xf32>
      %81 = arith.addf %76, %80 : vector<16x128xf32>
      %82 = vector.broadcast %48 : vector<1x128xf32> to vector<16x128xf32>
      %83 = arith.mulf %55, %82 : vector<16x128xf32>
      %84 = arith.addf %81, %83 : vector<16x128xf32>
      %85 = vector.broadcast %49 : vector<1x128xf32> to vector<16x128xf32>
      %86 = arith.mulf %78, %85 : vector<16x128xf32>
      %87 = arith.addf %84, %86 : vector<16x128xf32>
      %c0_39 = arith.constant 0 : index
      %c0_40 = arith.constant 0 : index
      %88 = vector.load %arg5[%c0_39, %c0_40] : memref<7x128xf32, #tpu.memory_space<vmem>>, vector<1x128xf32>
      %c1_41 = arith.constant 1 : index
      %c0_42 = arith.constant 0 : index
      %89 = vector.load %arg5[%c1_41, %c0_42] : memref<7x128xf32, #tpu.memory_space<vmem>>, vector<1x128xf32>
      %c2_43 = arith.constant 2 : index
      %c0_44 = arith.constant 0 : index
      %90 = vector.load %arg5[%c2_43, %c0_44] : memref<7x128xf32, #tpu.memory_space<vmem>>, vector<1x128xf32>
      %c3_45 = arith.constant 3 : index
      %c0_46 = arith.constant 0 : index
      %91 = vector.load %arg5[%c3_45, %c0_46] : memref<7x128xf32, #tpu.memory_space<vmem>>, vector<1x128xf32>
      %c4_47 = arith.constant 4 : index
      %c0_48 = arith.constant 0 : index
      %92 = vector.load %arg5[%c4_47, %c0_48] : memref<7x128xf32, #tpu.memory_space<vmem>>, vector<1x128xf32>
      %c5_49 = arith.constant 5 : index
      %c0_50 = arith.constant 0 : index
      %93 = vector.load %arg5[%c5_49, %c0_50] : memref<7x128xf32, #tpu.memory_space<vmem>>, vector<1x128xf32>
      %c6_51 = arith.constant 6 : index
      %c0_52 = arith.constant 0 : index
      %94 = vector.load %arg5[%c6_51, %c0_52] : memref<7x128xf32, #tpu.memory_space<vmem>>, vector<1x128xf32>
      %95 = vector.broadcast %91 : vector<1x128xf32> to vector<16x128xf32>
      %96 = arith.mulf %87, %95 : vector<16x128xf32>
      %c3_i32 = arith.constant 3 : i32
      %97 = tpu.dynamic_rotate %87 by %c3_i32 dim 1 : vector<16x128xf32>, i32 -> vector<16x128xf32>
      %98 = vector.broadcast %88 : vector<1x128xf32> to vector<16x128xf32>
      %99 = arith.mulf %97, %98 : vector<16x128xf32>
      %100 = arith.addf %96, %99 : vector<16x128xf32>
      %c2_i32 = arith.constant 2 : i32
      %101 = tpu.dynamic_rotate %87 by %c2_i32 dim 1 : vector<16x128xf32>, i32 -> vector<16x128xf32>
      %102 = vector.broadcast %89 : vector<1x128xf32> to vector<16x128xf32>
      %103 = arith.mulf %101, %102 : vector<16x128xf32>
      %104 = arith.addf %100, %103 : vector<16x128xf32>
      %c1_i32_53 = arith.constant 1 : i32
      %105 = tpu.dynamic_rotate %87 by %c1_i32_53 dim 1 : vector<16x128xf32>, i32 -> vector<16x128xf32>
      %106 = vector.broadcast %90 : vector<1x128xf32> to vector<16x128xf32>
      %107 = arith.mulf %105, %106 : vector<16x128xf32>
      %108 = arith.addf %104, %107 : vector<16x128xf32>
      %c127_i32 = arith.constant 127 : i32
      %109 = tpu.dynamic_rotate %87 by %c127_i32 dim 1 : vector<16x128xf32>, i32 -> vector<16x128xf32>
      %110 = vector.broadcast %92 : vector<1x128xf32> to vector<16x128xf32>
      %111 = arith.mulf %109, %110 : vector<16x128xf32>
      %112 = arith.addf %108, %111 : vector<16x128xf32>
      %c126_i32 = arith.constant 126 : i32
      %113 = tpu.dynamic_rotate %87 by %c126_i32 dim 1 : vector<16x128xf32>, i32 -> vector<16x128xf32>
      %114 = vector.broadcast %93 : vector<1x128xf32> to vector<16x128xf32>
      %115 = arith.mulf %113, %114 : vector<16x128xf32>
      %116 = arith.addf %112, %115 : vector<16x128xf32>
      %c125_i32 = arith.constant 125 : i32
      %117 = tpu.dynamic_rotate %87 by %c125_i32 dim 1 : vector<16x128xf32>, i32 -> vector<16x128xf32>
      %118 = vector.broadcast %94 : vector<1x128xf32> to vector<16x128xf32>
      %119 = arith.mulf %117, %118 : vector<16x128xf32>
      %120 = arith.addf %116, %119 : vector<16x128xf32>
      %cst_54 = arith.constant dense<0.000000e+00> : vector<128xf32>
      %121 = vector.multi_reduction <add>, %120, %cst_54 [0] : vector<16x128xf32> to vector<128xf32>
      %122 = vector.shape_cast %121 : vector<128xf32> to vector<1x128xf32>
      %123 = arith.mulf %120, %120 : vector<16x128xf32>
      %cst_55 = arith.constant dense<0.000000e+00> : vector<128xf32>
      %124 = vector.multi_reduction <add>, %123, %cst_55 [0] : vector<16x128xf32> to vector<128xf32>
      %125 = vector.shape_cast %124 : vector<128xf32> to vector<1x128xf32>
      %126 = tpu.concatenate %122, %125 in 0 : vector<1x128xf32>, vector<1x128xf32> -> vector<2x128xf32>
      %c0_56 = arith.constant 0 : index
      %c0_57 = arith.constant 0 : index
      %127 = vector.load %arg8[%c0_56, %c0_57] : memref<128x8xf32, #tpu.memory_space<vmem>>, vector<128x8xf32>
      %cst_58 = arith.constant dense<0.000000e+00> : vector<2x8xf32>
      %128 = tpu.matmul %126, %127, %cst_58 {dimension_numbers = #tpu.dot_dimension_numbers<[1], [0], [0], [1], [0, 0, 1, 1], [], []>} : vector<2x128xf32>, vector<128x8xf32>, vector<2x8xf32> -> vector<2x8xf32>
      %c0_59 = arith.constant 0 : index
      %c0_60 = arith.constant 0 : index
      %129 = vector.load %arg9[%c0_59, %c0_60] : memref<8x128xf32, #tpu.memory_space<vmem>>, vector<8x128xf32>
      %cst_61 = arith.constant dense<0.000000e+00> : vector<2x128xf32>
      %130 = tpu.matmul %128, %129, %cst_61 {dimension_numbers = #tpu.dot_dimension_numbers<[1], [0], [0], [1], [0, 0, 1, 1], [], []>} : vector<2x8xf32>, vector<8x128xf32>, vector<2x128xf32> -> vector<2x128xf32>
      %131 = vector.extract_strided_slice %130 {offsets = [0, 0], sizes = [1, 128], strides = [1, 1]} : vector<2x128xf32> to vector<1x128xf32>
      %132 = vector.extract_strided_slice %130 {offsets = [1, 0], sizes = [1, 128], strides = [1, 1]} : vector<2x128xf32> to vector<1x128xf32>
      %133 = arith.mulf %131, %131 : vector<1x128xf32>
      %134 = arith.subf %132, %133 : vector<1x128xf32>
      %cst_62 = arith.constant 0.000000e+00 : f32
      %135 = vector.broadcast %cst_62 : f32 to vector<1x128xf32>
      %136 = arith.maximumf %134, %135 : vector<1x128xf32>
      %137 = vector.broadcast %131 : vector<1x128xf32> to vector<16x128xf32>
      %138 = arith.subf %120, %137 : vector<16x128xf32>
      %cst_63 = arith.constant 9.99999974E-6 : f32
      %139 = vector.broadcast %cst_63 : f32 to vector<1x128xf32>
      %140 = arith.addf %136, %139 : vector<1x128xf32>
      %141 = math.rsqrt %140 : vector<1x128xf32>
      %cst_64 = arith.constant 1.000000e+00 : f32
      %142 = vector.broadcast %cst_64 : f32 to vector<1x128xf32>
      %143 = arith.mulf %142, %141 : vector<1x128xf32>
      %144 = vector.broadcast %143 : vector<1x128xf32> to vector<16x128xf32>
      %145 = arith.mulf %138, %144 : vector<16x128xf32>
      %cst_65 = arith.constant 0.000000e+00 : f32
      %146 = vector.broadcast %cst_65 : f32 to vector<16x128xf32>
      %147 = arith.maximumf %145, %146 : vector<16x128xf32>
      %c0_66 = arith.constant 0 : index
      %c0_67 = arith.constant 0 : index
      %148 = vector.load %arg6[%c0_66, %c0_67] : memref<9x128xf32, #tpu.memory_space<vmem>>, vector<1x128xf32>
      %c1_68 = arith.constant 1 : index
      %c0_69 = arith.constant 0 : index
      %149 = vector.load %arg6[%c1_68, %c0_69] : memref<9x128xf32, #tpu.memory_space<vmem>>, vector<1x128xf32>
      %c2_70 = arith.constant 2 : index
      %c0_71 = arith.constant 0 : index
      %150 = vector.load %arg6[%c2_70, %c0_71] : memref<9x128xf32, #tpu.memory_space<vmem>>, vector<1x128xf32>
      %c3_72 = arith.constant 3 : index
      %c0_73 = arith.constant 0 : index
      %151 = vector.load %arg6[%c3_72, %c0_73] : memref<9x128xf32, #tpu.memory_space<vmem>>, vector<1x128xf32>
      %c4_74 = arith.constant 4 : index
      %c0_75 = arith.constant 0 : index
      %152 = vector.load %arg6[%c4_74, %c0_75] : memref<9x128xf32, #tpu.memory_space<vmem>>, vector<1x128xf32>
      %c5_76 = arith.constant 5 : index
      %c0_77 = arith.constant 0 : index
      %153 = vector.load %arg6[%c5_76, %c0_77] : memref<9x128xf32, #tpu.memory_space<vmem>>, vector<1x128xf32>
      %c6_78 = arith.constant 6 : index
      %c0_79 = arith.constant 0 : index
      %154 = vector.load %arg6[%c6_78, %c0_79] : memref<9x128xf32, #tpu.memory_space<vmem>>, vector<1x128xf32>
      %c7_80 = arith.constant 7 : index
      %c0_81 = arith.constant 0 : index
      %155 = vector.load %arg6[%c7_80, %c0_81] : memref<9x128xf32, #tpu.memory_space<vmem>>, vector<1x128xf32>
      %c8_82 = arith.constant 8 : index
      %c0_83 = arith.constant 0 : index
      %156 = vector.load %arg6[%c8_82, %c0_83] : memref<9x128xf32, #tpu.memory_space<vmem>>, vector<1x128xf32>
      %c1_i32_84 = arith.constant 1 : i32
      %157 = tpu.dynamic_rotate %147 by %c1_i32_84 dim 0 : vector<16x128xf32>, i32 -> vector<16x128xf32>
      %158 = vector.broadcast %7 : vector<16x1xf32> to vector<16x128xf32>
      %159 = arith.mulf %157, %158 : vector<16x128xf32>
      %c15_i32_85 = arith.constant 15 : i32
      %160 = tpu.dynamic_rotate %147 by %c15_i32_85 dim 0 : vector<16x128xf32>, i32 -> vector<16x128xf32>
      %161 = vector.broadcast %9 : vector<16x1xf32> to vector<16x128xf32>
      %162 = arith.mulf %160, %161 : vector<16x128xf32>
      %c4_i32_86 = arith.constant 4 : i32
      %163 = tpu.dynamic_rotate %159 by %c4_i32_86 dim 1 : vector<16x128xf32>, i32 -> vector<16x128xf32>
      %c124_i32_87 = arith.constant 124 : i32
      %164 = tpu.dynamic_rotate %159 by %c124_i32_87 dim 1 : vector<16x128xf32>, i32 -> vector<16x128xf32>
      %165 = vector.broadcast %148 : vector<1x128xf32> to vector<16x128xf32>
      %166 = arith.mulf %163, %165 : vector<16x128xf32>
      %167 = vector.broadcast %149 : vector<1x128xf32> to vector<16x128xf32>
      %168 = arith.mulf %159, %167 : vector<16x128xf32>
      %169 = arith.addf %166, %168 : vector<16x128xf32>
      %170 = vector.broadcast %150 : vector<1x128xf32> to vector<16x128xf32>
      %171 = arith.mulf %164, %170 : vector<16x128xf32>
      %172 = arith.addf %169, %171 : vector<16x128xf32>
      %c4_i32_88 = arith.constant 4 : i32
      %173 = tpu.dynamic_rotate %147 by %c4_i32_88 dim 1 : vector<16x128xf32>, i32 -> vector<16x128xf32>
      %c124_i32_89 = arith.constant 124 : i32
      %174 = tpu.dynamic_rotate %147 by %c124_i32_89 dim 1 : vector<16x128xf32>, i32 -> vector<16x128xf32>
      %175 = vector.broadcast %151 : vector<1x128xf32> to vector<16x128xf32>
      %176 = arith.mulf %173, %175 : vector<16x128xf32>
      %177 = arith.addf %172, %176 : vector<16x128xf32>
      %178 = vector.broadcast %152 : vector<1x128xf32> to vector<16x128xf32>
      %179 = arith.mulf %147, %178 : vector<16x128xf32>
      %180 = arith.addf %177, %179 : vector<16x128xf32>
      %181 = vector.broadcast %153 : vector<1x128xf32> to vector<16x128xf32>
      %182 = arith.mulf %174, %181 : vector<16x128xf32>
      %183 = arith.addf %180, %182 : vector<16x128xf32>
      %c4_i32_90 = arith.constant 4 : i32
      %184 = tpu.dynamic_rotate %162 by %c4_i32_90 dim 1 : vector<16x128xf32>, i32 -> vector<16x128xf32>
      %c124_i32_91 = arith.constant 124 : i32
      %185 = tpu.dynamic_rotate %162 by %c124_i32_91 dim 1 : vector<16x128xf32>, i32 -> vector<16x128xf32>
      %186 = vector.broadcast %154 : vector<1x128xf32> to vector<16x128xf32>
      %187 = arith.mulf %184, %186 : vector<16x128xf32>
      %188 = arith.addf %183, %187 : vector<16x128xf32>
      %189 = vector.broadcast %155 : vector<1x128xf32> to vector<16x128xf32>
      %190 = arith.mulf %162, %189 : vector<16x128xf32>
      %191 = arith.addf %188, %190 : vector<16x128xf32>
      %192 = vector.broadcast %156 : vector<1x128xf32> to vector<16x128xf32>
      %193 = arith.mulf %185, %192 : vector<16x128xf32>
      %194 = arith.addf %191, %193 : vector<16x128xf32>
      %c0_92 = arith.constant 0 : index
      %c0_93 = arith.constant 0 : index
      %195 = vector.load %arg7[%c0_92, %c0_93] : memref<7x128xf32, #tpu.memory_space<vmem>>, vector<1x128xf32>
      %c1_94 = arith.constant 1 : index
      %c0_95 = arith.constant 0 : index
      %196 = vector.load %arg7[%c1_94, %c0_95] : memref<7x128xf32, #tpu.memory_space<vmem>>, vector<1x128xf32>
      %c2_96 = arith.constant 2 : index
      %c0_97 = arith.constant 0 : index
      %197 = vector.load %arg7[%c2_96, %c0_97] : memref<7x128xf32, #tpu.memory_space<vmem>>, vector<1x128xf32>
      %c3_98 = arith.constant 3 : index
      %c0_99 = arith.constant 0 : index
      %198 = vector.load %arg7[%c3_98, %c0_99] : memref<7x128xf32, #tpu.memory_space<vmem>>, vector<1x128xf32>
      %c4_100 = arith.constant 4 : index
      %c0_101 = arith.constant 0 : index
      %199 = vector.load %arg7[%c4_100, %c0_101] : memref<7x128xf32, #tpu.memory_space<vmem>>, vector<1x128xf32>
      %c5_102 = arith.constant 5 : index
      %c0_103 = arith.constant 0 : index
      %200 = vector.load %arg7[%c5_102, %c0_103] : memref<7x128xf32, #tpu.memory_space<vmem>>, vector<1x128xf32>
      %c6_104 = arith.constant 6 : index
      %c0_105 = arith.constant 0 : index
      %201 = vector.load %arg7[%c6_104, %c0_105] : memref<7x128xf32, #tpu.memory_space<vmem>>, vector<1x128xf32>
      %202 = vector.broadcast %198 : vector<1x128xf32> to vector<16x128xf32>
      %203 = arith.mulf %194, %202 : vector<16x128xf32>
      %c3_i32_106 = arith.constant 3 : i32
      %204 = tpu.dynamic_rotate %194 by %c3_i32_106 dim 1 : vector<16x128xf32>, i32 -> vector<16x128xf32>
      %205 = vector.broadcast %195 : vector<1x128xf32> to vector<16x128xf32>
      %206 = arith.mulf %204, %205 : vector<16x128xf32>
      %207 = arith.addf %203, %206 : vector<16x128xf32>
      %c2_i32_107 = arith.constant 2 : i32
      %208 = tpu.dynamic_rotate %194 by %c2_i32_107 dim 1 : vector<16x128xf32>, i32 -> vector<16x128xf32>
      %209 = vector.broadcast %196 : vector<1x128xf32> to vector<16x128xf32>
      %210 = arith.mulf %208, %209 : vector<16x128xf32>
      %211 = arith.addf %207, %210 : vector<16x128xf32>
      %c1_i32_108 = arith.constant 1 : i32
      %212 = tpu.dynamic_rotate %194 by %c1_i32_108 dim 1 : vector<16x128xf32>, i32 -> vector<16x128xf32>
      %213 = vector.broadcast %197 : vector<1x128xf32> to vector<16x128xf32>
      %214 = arith.mulf %212, %213 : vector<16x128xf32>
      %215 = arith.addf %211, %214 : vector<16x128xf32>
      %c127_i32_109 = arith.constant 127 : i32
      %216 = tpu.dynamic_rotate %194 by %c127_i32_109 dim 1 : vector<16x128xf32>, i32 -> vector<16x128xf32>
      %217 = vector.broadcast %199 : vector<1x128xf32> to vector<16x128xf32>
      %218 = arith.mulf %216, %217 : vector<16x128xf32>
      %219 = arith.addf %215, %218 : vector<16x128xf32>
      %c126_i32_110 = arith.constant 126 : i32
      %220 = tpu.dynamic_rotate %194 by %c126_i32_110 dim 1 : vector<16x128xf32>, i32 -> vector<16x128xf32>
      %221 = vector.broadcast %200 : vector<1x128xf32> to vector<16x128xf32>
      %222 = arith.mulf %220, %221 : vector<16x128xf32>
      %223 = arith.addf %219, %222 : vector<16x128xf32>
      %c125_i32_111 = arith.constant 125 : i32
      %224 = tpu.dynamic_rotate %194 by %c125_i32_111 dim 1 : vector<16x128xf32>, i32 -> vector<16x128xf32>
      %225 = vector.broadcast %201 : vector<1x128xf32> to vector<16x128xf32>
      %226 = arith.mulf %224, %225 : vector<16x128xf32>
      %227 = arith.addf %223, %226 : vector<16x128xf32>
      %cst_112 = arith.constant dense<0.000000e+00> : vector<128xf32>
      %228 = vector.multi_reduction <add>, %227, %cst_112 [0] : vector<16x128xf32> to vector<128xf32>
      %229 = vector.shape_cast %228 : vector<128xf32> to vector<1x128xf32>
      %230 = arith.mulf %227, %227 : vector<16x128xf32>
      %cst_113 = arith.constant dense<0.000000e+00> : vector<128xf32>
      %231 = vector.multi_reduction <add>, %230, %cst_113 [0] : vector<16x128xf32> to vector<128xf32>
      %232 = vector.shape_cast %231 : vector<128xf32> to vector<1x128xf32>
      %233 = tpu.concatenate %229, %232 in 0 : vector<1x128xf32>, vector<1x128xf32> -> vector<2x128xf32>
      %c0_114 = arith.constant 0 : index
      %c0_115 = arith.constant 0 : index
      %234 = vector.load %arg8[%c0_114, %c0_115] : memref<128x8xf32, #tpu.memory_space<vmem>>, vector<128x8xf32>
      %cst_116 = arith.constant dense<0.000000e+00> : vector<2x8xf32>
      %235 = tpu.matmul %233, %234, %cst_116 {dimension_numbers = #tpu.dot_dimension_numbers<[1], [0], [0], [1], [0, 0, 1, 1], [], []>} : vector<2x128xf32>, vector<128x8xf32>, vector<2x8xf32> -> vector<2x8xf32>
      %c0_117 = arith.constant 0 : index
      %c0_118 = arith.constant 0 : index
      %236 = vector.load %arg9[%c0_117, %c0_118] : memref<8x128xf32, #tpu.memory_space<vmem>>, vector<8x128xf32>
      %cst_119 = arith.constant dense<0.000000e+00> : vector<2x128xf32>
      %237 = tpu.matmul %235, %236, %cst_119 {dimension_numbers = #tpu.dot_dimension_numbers<[1], [0], [0], [1], [0, 0, 1, 1], [], []>} : vector<2x8xf32>, vector<8x128xf32>, vector<2x128xf32> -> vector<2x128xf32>
      %238 = vector.extract_strided_slice %237 {offsets = [0, 0], sizes = [1, 128], strides = [1, 1]} : vector<2x128xf32> to vector<1x128xf32>
      %239 = vector.extract_strided_slice %237 {offsets = [1, 0], sizes = [1, 128], strides = [1, 1]} : vector<2x128xf32> to vector<1x128xf32>
      %240 = arith.mulf %238, %238 : vector<1x128xf32>
      %241 = arith.subf %239, %240 : vector<1x128xf32>
      %cst_120 = arith.constant 0.000000e+00 : f32
      %242 = vector.broadcast %cst_120 : f32 to vector<1x128xf32>
      %243 = arith.maximumf %241, %242 : vector<1x128xf32>
      %244 = vector.broadcast %238 : vector<1x128xf32> to vector<16x128xf32>
      %245 = arith.subf %227, %244 : vector<16x128xf32>
      %cst_121 = arith.constant 9.99999974E-6 : f32
      %246 = vector.broadcast %cst_121 : f32 to vector<1x128xf32>
      %247 = arith.addf %243, %246 : vector<1x128xf32>
      %248 = math.rsqrt %247 : vector<1x128xf32>
      %249 = vector.broadcast %38 : f32 to vector<1x128xf32>
      %250 = arith.mulf %249, %248 : vector<1x128xf32>
      %251 = vector.broadcast %250 : vector<1x128xf32> to vector<16x128xf32>
      %252 = arith.mulf %245, %251 : vector<16x128xf32>
      %253 = arith.addf %37, %252 : vector<16x128xf32>
      %c0_122 = arith.constant 0 : index
      %c0_123 = arith.constant 0 : index
      %254 = vector.load %arg11[%c0_122, %c0_123] : memref<16x128xf32, #tpu.memory_space<vmem>>, vector<16x128xf32>
      tpu.vector_store %arg11[%c0_122, %c0_123], %253 {strides = array<i32>} : memref<16x128xf32, #tpu.memory_space<vmem>>, vector<16x128xf32>,
    } else {
    }
    %c0_12 = arith.constant 0 : index
    %c0_13 = arith.constant 0 : index
    %35 = vector.load %arg11[%c0_12, %c0_13] : memref<16x128xf32, #tpu.memory_space<vmem>>, vector<16x128xf32>
    %c0_14 = arith.constant 0 : index
    %c0_15 = arith.constant 0 : index
    %36 = vector.load %arg10[%c0_14, %c0_15] : memref<16x128xf32, #tpu.memory_space<vmem>>, vector<16x128xf32>
    tpu.vector_store %arg10[%c0_14, %c0_15], %35 {strides = array<i32>} : memref<16x128xf32, #tpu.memory_space<vmem>>, vector<16x128xf32>,
    return
  }
}

</mosaic_0001>

<llo_original>
// kernel: fwd.1
$region0: #{fwd.1}
  #allocation0 [shape = 'u32[]', space=smem, size = 0x4, offset = 0x4, fixed_abs, tag = 'smem constant byte address 0x4 - core index']
  #allocation1 [shape = 'u32[144,128]{1,0:T(1,128)}', space=vmem, size = 0x12000, scoped, tag = 'internal scratch']
  #allocation2 [shape = 'f32[16,128]{1,0:T(8,128)}', space=vmem, size = 0x2000, scoped, tag = 'scratch operand']
  %s0 = inlined_call_operand.vmem [shape: f32[5], index: 0, kind: input, shape index: {}]
  %s1 = inlined_call_operand.vmem [shape: f32[16,128], index: 1, kind: input, shape index: {}]
  %s2 = inlined_call_operand.vmem [shape: s32[1,128], index: 2, kind: input, shape index: {}]
  %s3 = inlined_call_operand.vmem [shape: f32[16,128], index: 3, kind: input, shape index: {}]
  %s4 = inlined_call_operand.vmem [shape: f32[9,128], index: 4, kind: input, shape index: {}]
  %s5 = inlined_call_operand.vmem [shape: f32[7,128], index: 5, kind: input, shape index: {}]
  %s6 = inlined_call_operand.vmem [shape: f32[9,128], index: 6, kind: input, shape index: {}]
  %s7 = inlined_call_operand.vmem [shape: f32[7,128], index: 7, kind: input, shape index: {}]
  %s8 = inlined_call_operand.vmem [shape: f32[128,8], index: 8, kind: input, shape index: {}]
  %s9 = inlined_call_operand.vmem [shape: f32[8,128], index: 9, kind: input, shape index: {}]
  %s10 = inlined_call_operand.vmem [shape: f32[16,128], index: 10, kind: output, shape index: {}]
  %s11 = sld [smem:[#allocation0]]
  $region66: #{fwd.1} parent=0
    _
  %s13 = ssub.s32 1, %s11
  %s14 = scalar_select 0, %s13, %s11
  $region1: #{fwd.1} parent=0
    #allocation3 [shape = 'u8[512]{0}', space=smem, size = 0x200, scoped, tag = 'input window, operand 0, single buffered']
    #allocation4 [shape = 's32[1]{0}', space=sflag, size = 0x4, scoped, tag = 'scoped memory for fwd.1']
    %15 = vsyncpa [#allocation4], 0
    // Predicated region
    $region2: #{fwd.1} parent=1 // pred_check
      _
    $region3: #{fwd.1} parent=1 // pred_check_branch
      %17 = sbr.rel (0) target = $region5
    $region4: #{fwd.1} parent=1 // pred_region
      %s19 = ssub.s32 16, 16
      %20 = vsyncadd [#allocation4], %s19
      %s22 = sshll.u32 %s0, 4
      %s23 = int_to_ptr.vmem [resolvable:$true] %s22
      %25 = dma.vmem_to_smem %s23, 16, [#allocation3], [#allocation4]
    $region5: #{fwd.1} parent=1 // pred_fallthru
      _
    // Predicated region
    $region6: #{fwd.1} parent=1 // pred_check
      _
    $region7: #{fwd.1} parent=1 // pred_check_branch
      %27 = sbr.rel (0) target = $region9
    $region8: #{fwd.1} parent=1 // pred_region
      _
    $region9: #{fwd.1} parent=1 // pred_fallthru
      _
    // Predicated region
    $region10: #{fwd.1} parent=1 // pred_check
      _
    $region11: #{fwd.1} parent=1 // pred_check_branch
      %29 = sbr.rel (0) target = $region13
    $region12: #{fwd.1} parent=1 // pred_region
      _
    $region13: #{fwd.1} parent=1 // pred_fallthru
      _
    // Predicated region
    $region14: #{fwd.1} parent=1 // pred_check
      _
    $region15: #{fwd.1} parent=1 // pred_check_branch
      %31 = sbr.rel (0) target = $region17
    $region16: #{fwd.1} parent=1 // pred_region
      _
    $region17: #{fwd.1} parent=1 // pred_fallthru
      _
    // Predicated region
    $region18: #{fwd.1} parent=1 // pred_check
      _
    $region19: #{fwd.1} parent=1 // pred_check_branch
      %33 = sbr.rel (0) target = $region21
    $region20: #{fwd.1} parent=1 // pred_region
      _
    $region21: #{fwd.1} parent=1 // pred_fallthru
      _
    // Predicated region
    $region22: #{fwd.1} parent=1 // pred_check
      _
    $region23: #{fwd.1} parent=1 // pred_check_branch
      %35 = sbr.rel (0) target = $region25
    $region24: #{fwd.1} parent=1 // pred_region
      _
    $region25: #{fwd.1} parent=1 // pred_fallthru
      _
    // Predicated region
    $region26: #{fwd.1} parent=1 // pred_check
      _
    $region27: #{fwd.1} parent=1 // pred_check_branch
      %37 = sbr.rel (0) target = $region29
    $region28: #{fwd.1} parent=1 // pred_region
      _
    $region29: #{fwd.1} parent=1 // pred_fallthru
      _
    // Predicated region
    $region30: #{fwd.1} parent=1 // pred_check
      _
    $region31: #{fwd.1} parent=1 // pred_check_branch
      %39 = sbr.rel (0) target = $region33
    $region32: #{fwd.1} parent=1 // pred_region
      _
    $region33: #{fwd.1} parent=1 // pred_fallthru
      _
    // Predicated region
    $region34: #{fwd.1} parent=1 // pred_check
      _
    $region35: #{fwd.1} parent=1 // pred_check_branch
      %41 = sbr.rel (0) target = $region37
    $region36: #{fwd.1} parent=1 // pred_region
      _
    $region37: #{fwd.1} parent=1 // pred_fallthru
      _
    // Predicated region
    $region38: #{fwd.1} parent=1 // pred_check
      _
    $region39: #{fwd.1} parent=1 // pred_check_branch
      %43 = sbr.rel (0) target = $region41
    $region40: #{fwd.1} parent=1 // pred_region
      _
    $region41: #{fwd.1} parent=1 // pred_fallthru
      _
    // Predicated region
    $region42: #{fwd.1} parent=1 // pred_check
      _
    $region43: #{fwd.1} parent=1 // pred_check_branch
      %45 = sbr.rel (0) target = $region45
    $region44: #{fwd.1} parent=1 // pred_region
      %46 = dma.done [#allocation4], 16
    $region45: #{fwd.1} parent=1 // pred_fallthru
      _
    %47 = sfence
    %v48 = vld [vmem:[%s1] sm:$0xff]
    %v49 = vld [vmem:[%s1 + $0x8] sm:$0xff]
    %v50 = vlaneseq
    %v51 = vshrl.u32 %v50, 7
    %v52 = vadd.s32 %v51, 8
    %vm53 = vcmp.gt.s32.totalorder %v51, 0
    %vm54 = vcmp.gt.s32.totalorder %v52, 0
    %vm55 = vcmp.lt.s32.totalorder %v51, 15
    %vm56 = vcmp.lt.s32.totalorder %v52, 15
    %v57 = vsel %vm53, 1, 0
    %v58 = vsel %vm54, 1, 0
    %v59 = vcvt.s32.f32 %v57
    %v60 = vcvt.s32.f32 %v58
    %v61 = vsel %vm55, 1, 0
    %v62 = vsel %vm56, 1, 0
    %v63 = vcvt.s32.f32 %v61
    %v64 = vcvt.s32.f32 %v62
    %v65 = vld [vmem:[%s2] sm:$0x1]
    %vm66 = vcmp.gt.s32.totalorder %v65, 0
    %vm67 = vcmp.lt.s32.totalorder %v65, 15
    %v68 = vsel %vm66, 1, 0
    %v69 = vcvt.s32.f32 %v68
    %v70 = vsel %vm67, 1, 0
    %v71 = vcvt.s32.f32 %v70
    %s72 = sld [smem:[#allocation3 + $0x3]]
    %v73 = vstv %s72
    %v74 = vmul.f32 %v73, %v48
    %v75 = vmul.f32 %v73, %v49
    %76 = vst [vmem:[#allocation2] sm:$0xff] %v74
    %77 = vst [vmem:[#allocation2 + $0x8] sm:$0xff] %v75
    %s78 = sld [smem:[#allocation3 + $0x1]]
    %p79 = scmp.gt.f32.partialorder %s78, 0.0
    // Predicated region
    $region46: #{fwd.1} parent=1 // pred_check
      %p80 = pneg %p79
    $region47: #{fwd.1} parent=1 // pred_check_branch
      %82 = sbr.rel (%p80) target = $region49
    $region48: #{fwd.1} parent=1 // pred_region
      %v83 = vld [vmem:[#allocation2] sm:$0xff]
      %v84 = vld [vmem:[#allocation2 + $0x8] sm:$0xff]
      %v85 = vrot.slane %v48, 7
      %v86 = vrot.slane %v49, 7
      %vm87 = vcmp.lt.s32.totalorder %v51, 1
      %v88 = vsel %vm87, %v85, %v86
      %v89 = vsel %vm87, %v86, %v85
      %vm90 = vcmp.eq.s32.totalorder %v57, 1
      %vm91 = vcmp.eq.s32.totalorder %v58, 1
      %v92 = vsel %vm90, %v89, -1e+30
      %v93 = vsel %vm91, %v88, -1e+30
      %v94 = vrot.slane %v48, 1
      %v95 = vrot.slane %v49, 1
      %vm96 = vcmp.lt.s32.totalorder %v51, 7
      %v97 = vsel %vm96, %v94, %v95
      %v98 = vsel %vm96, %v95, %v94
      %vm99 = vcmp.eq.s32.totalorder %v61, 1
      %vm100 = vcmp.eq.s32.totalorder %v62, 1
      %v101 = vsel %vm99, %v97, -1e+30
      %v102 = vsel %vm100, %v98, -1e+30
      %v103 = vmax.f32 %v92, %v101
      %v104 = vmax.f32 %v93, %v102
      %v105 = vmax.f32 %v103, %v48
      %v106 = vmax.f32 %v104, %v49
      %107 = vrot.lane.b32.xlu0 %v105, 4
      %v108 = vpop.permute.xlu0 %107
      %109 = vrot.lane.b32.xlu0 %v106, 4
      %v110 = vpop.permute.xlu0 %109
      %v111 = vlaneseq
      %v112 = vshrl.u32 %v111, 7
      %v113 = vsub.s32 0, %v112
      %v114 = vrot.slane %v68, %v113
      %vm115 = vcmp.eq.s32.totalorder %v114, 1
      %v116 = vsel %vm115, %v108, -1e+30
      %v117 = vsel %vm115, %v110, -1e+30
      %118 = vrot.lane.b32.xlu0 %v105, 124
      %v119 = vpop.permute.xlu0 %118
      %120 = vrot.lane.b32.xlu0 %v106, 124
      %v121 = vpop.permute.xlu0 %120
      %v122 = vlaneseq
      %v123 = vshrl.u32 %v122, 7
      %v124 = vsub.s32 0, %v123
      %v125 = vrot.slane %v70, %v124
      %vm126 = vcmp.eq.s32.totalorder %v125, 1
      %v127 = vsel %vm126, %v119, -1e+30
      %v128 = vsel %vm126, %v121, -1e+30
      %v129 = vmax.f32 %v116, %v127
      %v130 = vmax.f32 %v117, %v128
      %v131 = vmax.f32 %v129, %v105
      %v132 = vmax.f32 %v130, %v106
      %s133 = sld [smem:[#allocation3 + $0x1]]
      %v134 = vadd.f32 %v131, %v132
      %v135 = vrot.slane %v134, 4
      %v136 = vadd.f32 %v134, %v135
      %v137 = vrot.slane %v136, 2
      %v138 = vadd.f32 %v136, %v137
      %v139 = vrot.slane %v138, 1
      %v140 = vadd.f32 %v138, %v139
      %v141 = vmul.f32 %v131, %v131
      %v142 = vmul.f32 %v132, %v132
      %v143 = vadd.f32 %v141, %v142
      %v144 = vrot.slane %v143, 4
      %v145 = vadd.f32 %v143, %v144
      %v146 = vrot.slane %v145, 2
      %v147 = vadd.f32 %v145, %v146
      %v148 = vrot.slane %v147, 1
      %v149 = vadd.f32 %v147, %v148
      %vm150 = vcmask 1040384
      %v151 = vsel %vm150, %v140, %v149
      %v152 = vld [vmem:[%s8] sm:$0xff]
      %v153 = vld [vmem:[%s8 + $0x8] sm:$0xff]
      %v154 = vld [vmem:[%s8 + $0x10] sm:$0xff]
      %v155 = vld [vmem:[%s8 + $0x18] sm:$0xff]
      %v156 = vld [vmem:[%s8 + $0x20] sm:$0xff]
      %v157 = vld [vmem:[%s8 + $0x28] sm:$0xff]
      %v158 = vld [vmem:[%s8 + $0x30] sm:$0xff]
      %v159 = vld [vmem:[%s8 + $0x38] sm:$0xff]
      %v160 = vld [vmem:[%s8 + $0x40] sm:$0xff]
      %v161 = vld [vmem:[%s8 + $0x48] sm:$0xff]
      %v162 = vld [vmem:[%s8 + $0x50] sm:$0xff]
      %v163 = vld [vmem:[%s8 + $0x58] sm:$0xff]
      %v164 = vld [vmem:[%s8 + $0x60] sm:$0xff]
      %v165 = vld [vmem:[%s8 + $0x68] sm:$0xff]
      %v166 = vld [vmem:[%s8 + $0x70] sm:$0xff]
      %v167 = vld [vmem:[%s8 + $0x78] sm:$0xff]
      %168 = vmatprep.subr.mxu0 0.0
      %169 = vmatpush1.msra.mxu0 %v167
      %170 = vmatprep.subr.mxu0 0.0
      %171 = vmatpush1.msra.mxu0 %v166
      %172 = vmatprep.subr.mxu0 0.0
      %173 = vmatpush1.msra.mxu0 %v165
      %174 = vmatprep.subr.mxu0 0.0
      %175 = vmatpush1.msra.mxu0 %v164
      %176 = vmatprep.subr.mxu0 0.0
      %177 = vmatpush1.msra.mxu0 %v163
      %178 = vmatprep.subr.mxu0 0.0
      %179 = vmatpush1.msra.mxu0 %v162
      %180 = vmatprep.subr.mxu0 0.0
      %181 = vmatpush1.msra.mxu0 %v161
      %182 = vmatprep.subr.mxu0 0.0
      %183 = vmatpush1.msra.mxu0 %v160
      %184 = vmatprep.subr.mxu0 0.0
      %185 = vmatpush1.msra.mxu0 %v159
      %186 = vmatprep.subr.mxu0 0.0
      %187 = vmatpush1.msra.mxu0 %v158
      %188 = vmatprep.subr.mxu0 0.0
      %189 = vmatpush1.msra.mxu0 %v157
      %190 = vmatprep.subr.mxu0 0.0
      %191 = vmatpush1.msra.mxu0 %v156
      %192 = vmatprep.subr.mxu0 0.0
      %193 = vmatpush1.msra.mxu0 %v155
      %194 = vmatprep.subr.mxu0 0.0
      %195 = vmatpush1.msra.mxu0 %v154
      %196 = vmatprep.subr.mxu0 0.0
      %197 = vmatpush1.msra.mxu0 %v153
      %198 = vmatprep.subr.mxu0 0.0
      %199 = vmatpush1.msra.mxu0 %v152
      %200 = vmatprep.subr.mxu0 0.0
      %201 = vmatpush2.msra.mxu0 0.0
      %202 = vmatprep.subr.mxu0 0.0
      %203 = vmatpush2.msra.mxu0 0.0
      %204 = vmatprep.subr.mxu0 0.0
      %205 = vmatpush2.msra.mxu0 0.0
      %206 = vmatprep.subr.mxu0 0.0
      %207 = vmatpush2.msra.mxu0 0.0
      %208 = vmatprep.subr.mxu0 0.0
      %209 = vmatpush2.msra.mxu0 0.0
      %210 = vmatprep.subr.mxu0 0.0
      %211 = vmatpush2.msra.mxu0 0.0
      %212 = vmatprep.subr.mxu0 0.0
      %213 = vmatpush2.msra.mxu0 0.0
      %214 = vmatprep.subr.mxu0 0.0
      %215 = vmatpush2.msra.mxu0 0.0
      %216 = vmatprep.subr.mxu0 0.0
      %217 = vmatpush2.msra.mxu0 0.0
      %218 = vmatprep.subr.mxu0 0.0
      %219 = vmatpush2.msra.mxu0 0.0
      %220 = vmatprep.subr.mxu0 0.0
      %221 = vmatpush2.msra.mxu0 0.0
      %222 = vmatprep.subr.mxu0 0.0
      %223 = vmatpush2.msra.mxu0 0.0
      %224 = vmatprep.subr.mxu0 0.0
      %225 = vmatpush2.msra.mxu0 0.0
      %226 = vmatprep.subr.mxu0 0.0
      %227 = vmatpush2.msra.mxu0 0.0
      %228 = vmatprep.subr.mxu0 0.0
      %229 = vmatpush2.msra.mxu0 0.0
      %230 = vmatprep.subr.mxu0 0.0
      %231 = vmatpush2.msra.mxu0 0.0
      %232 = vmatprep.mubr.f32.mxu0 0.0
      %233 = vmatmul.mubr.f32.gmra.mxu0 %v151
      %v234 = vpop.f32.mrf.mxu0
      %v235 = vadd.f32 0.0, %v234
      %v236 = vpop.f32.mrf.mxu0
      %237 = vdwg.mxu0
      %v238 = vld [vmem:[%s9] sm:$0xff]
      %vm239 = vcmask 64512
      %v241 = vsel %vm239, %v235, 0
      %243 = vmatprep.subr.mxu0 0.0
      %244 = vmatpush1.msra.mxu0 0.0
      %245 = vmatprep.subr.mxu0 0.0
      %246 = vmatpush1.msra.mxu0 0.0
      %247 = vmatprep.subr.mxu0 0.0
      %248 = vmatpush1.msra.mxu0 0.0
      %249 = vmatprep.subr.mxu0 0.0
      %250 = vmatpush1.msra.mxu0 0.0
      %251 = vmatprep.subr.mxu0 0.0
      %252 = vmatpush1.msra.mxu0 0.0
      %253 = vmatprep.subr.mxu0 0.0
      %254 = vmatpush1.msra.mxu0 0.0
      %255 = vmatprep.subr.mxu0 0.0
      %256 = vmatpush1.msra.mxu0 0.0
      %257 = vmatprep.subr.mxu0 0.0
      %258 = vmatpush1.msra.mxu0 0.0
      %259 = vmatprep.subr.mxu0 0.0
      %260 = vmatpush1.msra.mxu0 0.0
      %261 = vmatprep.subr.mxu0 0.0
      %262 = vmatpush1.msra.mxu0 0.0
      %263 = vmatprep.subr.mxu0 0.0
      %264 = vmatpush1.msra.mxu0 0.0
      %265 = vmatprep.subr.mxu0 0.0
      %266 = vmatpush1.msra.mxu0 0.0
      %267 = vmatprep.subr.mxu0 0.0
      %268 = vmatpush1.msra.mxu0 0.0
      %269 = vmatprep.subr.mxu0 0.0
      %270 = vmatpush1.msra.mxu0 0.0
      %271 = vmatprep.subr.mxu0 0.0
      %272 = vmatpush1.msra.mxu0 0.0
      %273 = vmatprep.subr.mxu0 0.0
      %274 = vmatpush1.msra.mxu0 %v238
      %275 = vmatprep.subr.mxu0 0.0
      %276 = vmatpush2.msra.mxu0 0.0
      %277 = vmatprep.subr.mxu0 0.0
      %278 = vmatpush2.msra.mxu0 0.0
      %279 = vmatprep.subr.mxu0 0.0
      %280 = vmatpush2.msra.mxu0 0.0
      %281 = vmatprep.subr.mxu0 0.0
      %282 = vmatpush2.msra.mxu0 0.0
      %283 = vmatprep.subr.mxu0 0.0
      %284 = vmatpush2.msra.mxu0 0.0
      %285 = vmatprep.subr.mxu0 0.0
      %286 = vmatpush2.msra.mxu0 0.0
      %287 = vmatprep.subr.mxu0 0.0
      %288 = vmatpush2.msra.mxu0 0.0
      %289 = vmatprep.subr.mxu0 0.0
      %290 = vmatpush2.msra.mxu0 0.0
      %291 = vmatprep.subr.mxu0 0.0
      %292 = vmatpush2.msra.mxu0 0.0
      %293 = vmatprep.subr.mxu0 0.0
      %294 = vmatpush2.msra.mxu0 0.0
      %295 = vmatprep.subr.mxu0 0.0
      %296 = vmatpush2.msra.mxu0 0.0
      %297 = vmatprep.subr.mxu0 0.0
      %298 = vmatpush2.msra.mxu0 0.0
      %299 = vmatprep.subr.mxu0 0.0
      %300 = vmatpush2.msra.mxu0 0.0
      %301 = vmatprep.subr.mxu0 0.0
      %302 = vmatpush2.msra.mxu0 0.0
      %303 = vmatprep.subr.mxu0 0.0
      %304 = vmatpush2.msra.mxu0 0.0
      %305 = vmatprep.subr.mxu0 0.0
      %306 = vmatpush2.msra.mxu0 0.0
      %307 = vmatprep.mubr.f32.mxu0 0.0
      %308 = vmatmul.mubr.f32.gmra.mxu0 %v241
      %v309 = vpop.f32.mrf.mxu0
      %v310 = vadd.f32 0.0, %v309
      %v311 = vpop.f32.mrf.mxu0
      %312 = vdwg.mxu0
      %v313 = vmul.f32 %v310, %v310
      %v315 = vrot.slane %v313, 7
      %v317 = vsub.f32 %v310, %v315
      %v318 = vmax.f32 %v317, 0.0
      %v319 = vlaneseq
      %v320 = vshrl.u32 %v319, 7
      %v321 = vsub.s32 0, %v320
      %v322 = vrot.slane %v310, %v321
      %v323 = vsub.f32 %v131, %v322
      %v324 = vsub.f32 %v132, %v322
      %v325 = vadd.f32 %v318, 1e-05
      %v326 = vrsqrt.pop %v325
      %v327 = vstv %s133
      %v328 = vmul.f32 %v327, %v326
      %v329 = vlaneseq
      %v330 = vshrl.u32 %v329, 7
      %v331 = vsub.s32 1, %v330
      %v332 = vrot.slane %v328, %v331
      %v333 = vmul.f32 %v323, %v332
      %v334 = vmul.f32 %v324, %v332
      %v335 = vadd.f32 %v83, %v333
      %v336 = vadd.f32 %v84, %v334
      %337 = vst [vmem:[#allocation2] sm:$0xff] %v335
      %338 = vst [vmem:[#allocation2 + $0x8] sm:$0xff] %v336
    $region49: #{fwd.1} parent=1 // pred_fallthru
      _
    %s339 = sld [smem:[#allocation3 + $0x2]]
    %p340 = scmp.gt.f32.partialorder %s339, 0.0
    // Predicated region
    $region50: #{fwd.1} parent=1 // pred_check
      %p341 = pneg %p340
    $region51: #{fwd.1} parent=1 // pred_check_branch
      %343 = sbr.rel (%p341) target = $region53
    $region52: #{fwd.1} parent=1 // pred_region
      %v344 = vld [vmem:[#allocation2] sm:$0xff]
      %v345 = vld [vmem:[#allocation2 + $0x8] sm:$0xff]
      %v346 = vrot.slane %v48, 7
      %v347 = vrot.slane %v49, 7
      %vm348 = vcmp.lt.s32.totalorder %v51, 1
      %v349 = vsel %vm348, %v346, %v347
      %v350 = vsel %vm348, %v347, %v346
      %v351 = vmul.f32 %v350, %v59
      %v352 = vmul.f32 %v349, %v60
      %v353 = vrot.slane %v48, 1
      %v354 = vrot.slane %v49, 1
      %vm355 = vcmp.lt.s32.totalorder %v51, 7
      %v356 = vsel %vm355, %v353, %v354
      %v357 = vsel %vm355, %v354, %v353
      %v358 = vmul.f32 %v356, %v63
      %v359 = vmul.f32 %v357, %v64
      %v360 = vadd.f32 %v351, %v358
      %v361 = vadd.f32 %v352, %v359
      %v362 = vadd.f32 %v360, %v48
      %v363 = vadd.f32 %v361, %v49
      %364 = vrot.lane.b32.xlu0 %v362, 4
      %v365 = vpop.permute.xlu0 %364
      %366 = vrot.lane.b32.xlu0 %v363, 4
      %v367 = vpop.permute.xlu0 %366
      %v369 = vlaneseq
      %v370 = vshrl.u32 %v369, 7
      %v371 = vsub.s32 0, %v370
      %v372 = vrot.slane %v69, %v371
      %v374 = vmul.f32 %v365, %v372
      %v375 = vmul.f32 %v367, %v372
      %376 = vrot.lane.b32.xlu0 %v362, 124
      %v377 = vpop.permute.xlu0 %376
      %378 = vrot.lane.b32.xlu0 %v363, 124
      %v379 = vpop.permute.xlu0 %378
      %v381 = vlaneseq
      %v382 = vshrl.u32 %v381, 7
      %v383 = vsub.s32 0, %v382
      %v384 = vrot.slane %v71, %v383
      %v386 = vmul.f32 %v377, %v384
      %v387 = vmul.f32 %v379, %v384
      %v388 = vadd.f32 %v374, %v386
      %v389 = vadd.f32 %v375, %v387
      %v390 = vadd.f32 %v388, %v362
      %v391 = vadd.f32 %v389, %v363
      %v392 = vld [vmem:[%s3] sm:$0xff]
      %v393 = vld [vmem:[%s3 + $0x8] sm:$0xff]
      %v394 = vmul.f32 %v390, %v392
      %v395 = vmul.f32 %v391, %v393
      %s396 = sld [smem:[#allocation3 + $0x2]]
      %v397 = vadd.f32 %v394, %v395
      %v398 = vrot.slane %v397, 4
      %v399 = vadd.f32 %v397, %v398
      %v400 = vrot.slane %v399, 2
      %v401 = vadd.f32 %v399, %v400
      %v402 = vrot.slane %v401, 1
      %v403 = vadd.f32 %v401, %v402
      %v404 = vmul.f32 %v394, %v394
      %v405 = vmul.f32 %v395, %v395
      %v406 = vadd.f32 %v404, %v405
      %v407 = vrot.slane %v406, 4
      %v408 = vadd.f32 %v406, %v407
      %v409 = vrot.slane %v408, 2
      %v410 = vadd.f32 %v408, %v409
      %v411 = vrot.slane %v410, 1
      %v412 = vadd.f32 %v410, %v411
      %vm413 = vcmask 1040384
      %v414 = vsel %vm413, %v403, %v412
      %v415 = vld [vmem:[%s8] sm:$0xff]
      %v416 = vld [vmem:[%s8 + $0x8] sm:$0xff]
      %v417 = vld [vmem:[%s8 + $0x10] sm:$0xff]
      %v418 = vld [vmem:[%s8 + $0x18] sm:$0xff]
      %v419 = vld [vmem:[%s8 + $0x20] sm:$0xff]
      %v420 = vld [vmem:[%s8 + $0x28] sm:$0xff]
      %v421 = vld [vmem:[%s8 + $0x30] sm:$0xff]
      %v422 = vld [vmem:[%s8 + $0x38] sm:$0xff]
      %v423 = vld [vmem:[%s8 + $0x40] sm:$0xff]
      %v424 = vld [vmem:[%s8 + $0x48] sm:$0xff]
      %v425 = vld [vmem:[%s8 + $0x50] sm:$0xff]
      %v426 = vld [vmem:[%s8 + $0x58] sm:$0xff]
      %v427 = vld [vmem:[%s8 + $0x60] sm:$0xff]
      %v428 = vld [vmem:[%s8 + $0x68] sm:$0xff]
      %v429 = vld [vmem:[%s8 + $0x70] sm:$0xff]
      %v430 = vld [vmem:[%s8 + $0x78] sm:$0xff]
      %431 = vmatprep.subr.mxu0 0.0
      %432 = vmatpush1.msra.mxu0 %v430
      %433 = vmatprep.subr.mxu0 0.0
      %434 = vmatpush1.msra.mxu0 %v429
      %435 = vmatprep.subr.mxu0 0.0
      %436 = vmatpush1.msra.mxu0 %v428
      %437 = vmatprep.subr.mxu0 0.0
      %438 = vmatpush1.msra.mxu0 %v427
      %439 = vmatprep.subr.mxu0 0.0
      %440 = vmatpush1.msra.mxu0 %v426
      %441 = vmatprep.subr.mxu0 0.0
      %442 = vmatpush1.msra.mxu0 %v425
      %443 = vmatprep.subr.mxu0 0.0
      %444 = vmatpush1.msra.mxu0 %v424
      %445 = vmatprep.subr.mxu0 0.0
      %446 = vmatpush1.msra.mxu0 %v423
      %447 = vmatprep.subr.mxu0 0.0
      %448 = vmatpush1.msra.mxu0 %v422
      %449 = vmatprep.subr.mxu0 0.0
      %450 = vmatpush1.msra.mxu0 %v421
      %451 = vmatprep.subr.mxu0 0.0
      %452 = vmatpush1.msra.mxu0 %v420
      %453 = vmatprep.subr.mxu0 0.0
      %454 = vmatpush1.msra.mxu0 %v419
      %455 = vmatprep.subr.mxu0 0.0
      %456 = vmatpush1.msra.mxu0 %v418
      %457 = vmatprep.subr.mxu0 0.0
      %458 = vmatpush1.msra.mxu0 %v417
      %459 = vmatprep.subr.mxu0 0.0
      %460 = vmatpush1.msra.mxu0 %v416
      %461 = vmatprep.subr.mxu0 0.0
      %462 = vmatpush1.msra.mxu0 %v415
      %463 = vmatprep.subr.mxu0 0.0
      %464 = vmatpush2.msra.mxu0 0.0
      %465 = vmatprep.subr.mxu0 0.0
      %466 = vmatpush2.msra.mxu0 0.0
      %467 = vmatprep.subr.mxu0 0.0
      %468 = vmatpush2.msra.mxu0 0.0
      %469 = vmatprep.subr.mxu0 0.0
      %470 = vmatpush2.msra.mxu0 0.0
      %471 = vmatprep.subr.mxu0 0.0
      %472 = vmatpush2.msra.mxu0 0.0
      %473 = vmatprep.subr.mxu0 0.0
      %474 = vmatpush2.msra.mxu0 0.0
      %475 = vmatprep.subr.mxu0 0.0
      %476 = vmatpush2.msra.mxu0 0.0
      %477 = vmatprep.subr.mxu0 0.0
      %478 = vmatpush2.msra.mxu0 0.0
      %479 = vmatprep.subr.mxu0 0.0
      %480 = vmatpush2.msra.mxu0 0.0
      %481 = vmatprep.subr.mxu0 0.0
      %482 = vmatpush2.msra.mxu0 0.0
      %483 = vmatprep.subr.mxu0 0.0
      %484 = vmatpush2.msra.mxu0 0.0
      %485 = vmatprep.subr.mxu0 0.0
      %486 = vmatpush2.msra.mxu0 0.0
      %487 = vmatprep.subr.mxu0 0.0
      %488 = vmatpush2.msra.mxu0 0.0
      %489 = vmatprep.subr.mxu0 0.0
      %490 = vmatpush2.msra.mxu0 0.0
      %491 = vmatprep.subr.mxu0 0.0
      %492 = vmatpush2.msra.mxu0 0.0
      %493 = vmatprep.subr.mxu0 0.0
      %494 = vmatpush2.msra.mxu0 0.0
      %495 = vmatprep.mubr.f32.mxu0 0.0
      %496 = vmatmul.mubr.f32.gmra.mxu0 %v414
      %v497 = vpop.f32.mrf.mxu0
      %v498 = vadd.f32 0.0, %v497
      %v499 = vpop.f32.mrf.mxu0
      %500 = vdwg.mxu0
      %v501 = vld [vmem:[%s9] sm:$0xff]
      %vm502 = vcmask 64512
      %v504 = vsel %vm502, %v498, 0
      %506 = vmatprep.subr.mxu0 0.0
      %507 = vmatpush1.msra.mxu0 0.0
      %508 = vmatprep.subr.mxu0 0.0
      %509 = vmatpush1.msra.mxu0 0.0
      %510 = vmatprep.subr.mxu0 0.0
      %511 = vmatpush1.msra.mxu0 0.0
      %512 = vmatprep.subr.mxu0 0.0
      %513 = vmatpush1.msra.mxu0 0.0
      %514 = vmatprep.subr.mxu0 0.0
      %515 = vmatpush1.msra.mxu0 0.0
      %516 = vmatprep.subr.mxu0 0.0
      %517 = vmatpush1.msra.mxu0 0.0
      %518 = vmatprep.subr.mxu0 0.0
      %519 = vmatpush1.msra.mxu0 0.0
      %520 = vmatprep.subr.mxu0 0.0
      %521 = vmatpush1.msra.mxu0 0.0
      %522 = vmatprep.subr.mxu0 0.0
      %523 = vmatpush1.msra.mxu0 0.0
      %524 = vmatprep.subr.mxu0 0.0
      %525 = vmatpush1.msra.mxu0 0.0
      %526 = vmatprep.subr.mxu0 0.0
      %527 = vmatpush1.msra.mxu0 0.0
      %528 = vmatprep.subr.mxu0 0.0
      %529 = vmatpush1.msra.mxu0 0.0
      %530 = vmatprep.subr.mxu0 0.0
      %531 = vmatpush1.msra.mxu0 0.0
      %532 = vmatprep.subr.mxu0 0.0
      %533 = vmatpush1.msra.mxu0 0.0
      %534 = vmatprep.subr.mxu0 0.0
      %535 = vmatpush1.msra.mxu0 0.0
      %536 = vmatprep.subr.mxu0 0.0
      %537 = vmatpush1.msra.mxu0 %v501
      %538 = vmatprep.subr.mxu0 0.0
      %539 = vmatpush2.msra.mxu0 0.0
      %540 = vmatprep.subr.mxu0 0.0
      %541 = vmatpush2.msra.mxu0 0.0
      %542 = vmatprep.subr.mxu0 0.0
      %543 = vmatpush2.msra.mxu0 0.0
      %544 = vmatprep.subr.mxu0 0.0
      %545 = vmatpush2.msra.mxu0 0.0
      %546 = vmatprep.subr.mxu0 0.0
      %547 = vmatpush2.msra.mxu0 0.0
      %548 = vmatprep.subr.mxu0 0.0
      %549 = vmatpush2.msra.mxu0 0.0
      %550 = vmatprep.subr.mxu0 0.0
      %551 = vmatpush2.msra.mxu0 0.0
      %552 = vmatprep.subr.mxu0 0.0
      %553 = vmatpush2.msra.mxu0 0.0
      %554 = vmatprep.subr.mxu0 0.0
      %555 = vmatpush2.msra.mxu0 0.0
      %556 = vmatprep.subr.mxu0 0.0
      %557 = vmatpush2.msra.mxu0 0.0
      %558 = vmatprep.subr.mxu0 0.0
      %559 = vmatpush2.msra.mxu0 0.0
      %560 = vmatprep.subr.mxu0 0.0
      %561 = vmatpush2.msra.mxu0 0.0
      %562 = vmatprep.subr.mxu0 0.0
      %563 = vmatpush2.msra.mxu0 0.0
      %564 = vmatprep.subr.mxu0 0.0
      %565 = vmatpush2.msra.mxu0 0.0
      %566 = vmatprep.subr.mxu0 0.0
      %567 = vmatpush2.msra.mxu0 0.0
      %568 = vmatprep.subr.mxu0 0.0
      %569 = vmatpush2.msra.mxu0 0.0
      %570 = vmatprep.mubr.f32.mxu0 0.0
      %571 = vmatmul.mubr.f32.gmra.mxu0 %v504
      %v572 = vpop.f32.mrf.mxu0
      %v573 = vadd.f32 0.0, %v572
      %v574 = vpop.f32.mrf.mxu0
      %575 = vdwg.mxu0
      %v576 = vmul.f32 %v573, %v573
      %v578 = vrot.slane %v576, 7
      %v580 = vsub.f32 %v573, %v578
      %v581 = vmax.f32 %v580, 0.0
      %v582 = vlaneseq
      %v583 = vshrl.u32 %v582, 7
      %v584 = vsub.s32 0, %v583
      %v585 = vrot.slane %v573, %v584
      %v586 = vsub.f32 %v394, %v585
      %v587 = vsub.f32 %v395, %v585
      %v588 = vadd.f32 %v581, 1e-05
      %v589 = vrsqrt.pop %v588
      %v590 = vstv %s396
      %v591 = vmul.f32 %v590, %v589
      %v592 = vlaneseq
      %v593 = vshrl.u32 %v592, 7
      %v594 = vsub.s32 1, %v593
      %v595 = vrot.slane %v591, %v594
      %v596 = vmul.f32 %v586, %v595
      %v597 = vmul.f32 %v587, %v595
      %v598 = vadd.f32 %v344, %v596
      %v599 = vadd.f32 %v345, %v597
      %600 = vst [vmem:[#allocation2] sm:$0xff] %v598
      %601 = vst [vmem:[#allocation2 + $0x8] sm:$0xff] %v599
    $region53: #{fwd.1} parent=1 // pred_fallthru
      _
    %s602 = sld [smem:[#allocation3 + $0x4]]
    %p603 = scmp.gt.f32.partialorder %s602, 0.0
    // Predicated region
    $region54: #{fwd.1} parent=1 // pred_check
      %p604 = pneg %p603
    $region55: #{fwd.1} parent=1 // pred_check_branch
      %606 = sbr.rel (%p604) target = $region57
    $region56: #{fwd.1} parent=1 // pred_region
      %v607 = vld [vmem:[#allocation2] sm:$0xff]
      %v608 = vld [vmem:[#allocation2 + $0x8] sm:$0xff]
      %s609 = sld [smem:[#allocation3 + $0x4]]
      %v610 = vmax.f32 %v48, 0.0
      %v611 = vmax.f32 %v49, 0.0
      %v612 = vld [vmem:[%s4] sm:$0x1]
      %v613 = vld [vmem:[%s4 + $0x1] sm:$0x1]
      %v614 = vld [vmem:[%s4 + $0x2] sm:$0x1]
      %v615 = vld [vmem:[%s4 + $0x3] sm:$0x1]
      %v616 = vld [vmem:[%s4 + $0x4] sm:$0x1]
      %v617 = vld [vmem:[%s4 + $0x5] sm:$0x1]
      %v618 = vld [vmem:[%s4 + $0x6] sm:$0x1]
      %v619 = vld [vmem:[%s4 + $0x7] sm:$0x1]
      %v620 = vld [vmem:[%s4 + $0x8] sm:$0x1]
      %v621 = vrot.slane %v610, 7
      %v622 = vrot.slane %v611, 7
      %vm623 = vcmp.lt.s32.totalorder %v51, 1
      %v624 = vsel %vm623, %v621, %v622
      %v625 = vsel %vm623, %v622, %v621
      %v626 = vmul.f32 %v625, %v59
      %v627 = vmul.f32 %v624, %v60
      %v628 = vrot.slane %v610, 1
      %v629 = vrot.slane %v611, 1
      %vm630 = vcmp.lt.s32.totalorder %v51, 7
      %v631 = vsel %vm630, %v628, %v629
      %v632 = vsel %vm630, %v629, %v628
      %v633 = vmul.f32 %v631, %v63
      %v634 = vmul.f32 %v632, %v64
      %635 = vrot.lane.b32.xlu0 %v626, 4
      %v636 = vpop.permute.xlu0 %635
      %637 = vrot.lane.b32.xlu0 %v627, 4
      %v638 = vpop.permute.xlu0 %637
      %639 = vrot.lane.b32.xlu0 %v626, 124
      %v640 = vpop.permute.xlu0 %639
      %641 = vrot.lane.b32.xlu0 %v627, 124
      %v642 = vpop.permute.xlu0 %641
      %v643 = vlaneseq
      %v644 = vshrl.u32 %v643, 7
      %v645 = vsub.s32 0, %v644
      %v646 = vrot.slane %v612, %v645
      %v647 = vmul.f32 %v636, %v646
      %v648 = vmul.f32 %v638, %v646
      %v649 = vlaneseq
      %v650 = vshrl.u32 %v649, 7
      %v651 = vsub.s32 0, %v650
      %v652 = vrot.slane %v613, %v651
      %v653 = vmul.f32 %v626, %v652
      %v654 = vmul.f32 %v627, %v652
      %v655 = vadd.f32 %v647, %v653
      %v656 = vadd.f32 %v648, %v654
      %v657 = vlaneseq
      %v658 = vshrl.u32 %v657, 7
      %v659 = vsub.s32 0, %v658
      %v660 = vrot.slane %v614, %v659
      %v661 = vmul.f32 %v640, %v660
      %v662 = vmul.f32 %v642, %v660
      %v663 = vadd.f32 %v655, %v661
      %v664 = vadd.f32 %v656, %v662
      %665 = vrot.lane.b32.xlu0 %v610, 4
      %v666 = vpop.permute.xlu0 %665
      %667 = vrot.lane.b32.xlu0 %v611, 4
      %v668 = vpop.permute.xlu0 %667
      %669 = vrot.lane.b32.xlu0 %v610, 124
      %v670 = vpop.permute.xlu0 %669
      %671 = vrot.lane.b32.xlu0 %v611, 124
      %v672 = vpop.permute.xlu0 %671
      %v673 = vlaneseq
      %v674 = vshrl.u32 %v673, 7
      %v675 = vsub.s32 0, %v674
      %v676 = vrot.slane %v615, %v675
      %v677 = vmul.f32 %v666, %v676
      %v678 = vmul.f32 %v668, %v676
      %v679 = vadd.f32 %v663, %v677
      %v680 = vadd.f32 %v664, %v678
      %v681 = vlaneseq
      %v682 = vshrl.u32 %v681, 7
      %v683 = vsub.s32 0, %v682
      %v684 = vrot.slane %v616, %v683
      %v685 = vmul.f32 %v610, %v684
      %v686 = vmul.f32 %v611, %v684
      %v687 = vadd.f32 %v679, %v685
      %v688 = vadd.f32 %v680, %v686
      %v689 = vlaneseq
      %v690 = vshrl.u32 %v689, 7
      %v691 = vsub.s32 0, %v690
      %v692 = vrot.slane %v617, %v691
      %v693 = vmul.f32 %v670, %v692
      %v694 = vmul.f32 %v672, %v692
      %v695 = vadd.f32 %v687, %v693
      %v696 = vadd.f32 %v688, %v694
      %697 = vrot.lane.b32.xlu0 %v633, 4
      %v698 = vpop.permute.xlu0 %697
      %699 = vrot.lane.b32.xlu0 %v634, 4
      %v700 = vpop.permute.xlu0 %699
      %701 = vrot.lane.b32.xlu0 %v633, 124
      %v702 = vpop.permute.xlu0 %701
      %703 = vrot.lane.b32.xlu0 %v634, 124
      %v704 = vpop.permute.xlu0 %703
      %v705 = vlaneseq
      %v706 = vshrl.u32 %v705, 7
      %v707 = vsub.s32 0, %v706
      %v708 = vrot.slane %v618, %v707
      %v709 = vmul.f32 %v698, %v708
      %v710 = vmul.f32 %v700, %v708
      %v711 = vadd.f32 %v695, %v709
      %v712 = vadd.f32 %v696, %v710
      %v713 = vlaneseq
      %v714 = vshrl.u32 %v713, 7
      %v715 = vsub.s32 0, %v714
      %v716 = vrot.slane %v619, %v715
      %v717 = vmul.f32 %v633, %v716
      %v718 = vmul.f32 %v634, %v716
      %v719 = vadd.f32 %v711, %v717
      %v720 = vadd.f32 %v712, %v718
      %v721 = vlaneseq
      %v722 = vshrl.u32 %v721, 7
      %v723 = vsub.s32 0, %v722
      %v724 = vrot.slane %v620, %v723
      %v725 = vmul.f32 %v702, %v724
      %v726 = vmul.f32 %v704, %v724
      %v727 = vadd.f32 %v719, %v725
      %v728 = vadd.f32 %v720, %v726
      %v729 = vld [vmem:[%s5] sm:$0x1]
      %v730 = vld [vmem:[%s5 + $0x1] sm:$0x1]
      %v731 = vld [vmem:[%s5 + $0x2] sm:$0x1]
      %v732 = vld [vmem:[%s5 + $0x3] sm:$0x1]
      %v733 = vld [vmem:[%s5 + $0x4] sm:$0x1]
      %v734 = vld [vmem:[%s5 + $0x5] sm:$0x1]
      %v735 = vld [vmem:[%s5 + $0x6] sm:$0x1]
      %v736 = vlaneseq
      %v737 = vshrl.u32 %v736, 7
      %v738 = vsub.s32 0, %v737
      %v739 = vrot.slane %v732, %v738
      %v740 = vmul.f32 %v727, %v739
      %v741 = vmul.f32 %v728, %v739
      %742 = vrot.lane.b32.xlu0 %v727, 3
      %v743 = vpop.permute.xlu0 %742
      %744 = vrot.lane.b32.xlu0 %v728, 3
      %v745 = vpop.permute.xlu0 %744
      %v746 = vlaneseq
      %v747 = vshrl.u32 %v746, 7
      %v748 = vsub.s32 0, %v747
      %v749 = vrot.slane %v729, %v748
      %v750 = vmul.f32 %v743, %v749
      %v751 = vmul.f32 %v745, %v749
      %v752 = vadd.f32 %v740, %v750
      %v753 = vadd.f32 %v741, %v751
      %754 = vrot.lane.b32.xlu0 %v727, 2
      %v755 = vpop.permute.xlu0 %754
      %756 = vrot.lane.b32.xlu0 %v728, 2
      %v757 = vpop.permute.xlu0 %756
      %v758 = vlaneseq
      %v759 = vshrl.u32 %v758, 7
      %v760 = vsub.s32 0, %v759
      %v761 = vrot.slane %v730, %v760
      %v762 = vmul.f32 %v755, %v761
      %v763 = vmul.f32 %v757, %v761
      %v764 = vadd.f32 %v752, %v762
      %v765 = vadd.f32 %v753, %v763
      %766 = vrot.lane.b32.xlu0 %v727, 1
      %v767 = vpop.permute.xlu0 %766
      %768 = vrot.lane.b32.xlu0 %v728, 1
      %v769 = vpop.permute.xlu0 %768
      %v770 = vlaneseq
      %v771 = vshrl.u32 %v770, 7
      %v772 = vsub.s32 0, %v771
      %v773 = vrot.slane %v731, %v772
      %v774 = vmul.f32 %v767, %v773
      %v775 = vmul.f32 %v769, %v773
      %v776 = vadd.f32 %v764, %v774
      %v777 = vadd.f32 %v765, %v775
      %778 = vrot.lane.b32.xlu0 %v727, 127
      %v779 = vpop.permute.xlu0 %778
      %780 = vrot.lane.b32.xlu0 %v728, 127
      %v781 = vpop.permute.xlu0 %780
      %v782 = vlaneseq
      %v783 = vshrl.u32 %v782, 7
      %v784 = vsub.s32 0, %v783
      %v785 = vrot.slane %v733, %v784
      %v786 = vmul.f32 %v779, %v785
      %v787 = vmul.f32 %v781, %v785
      %v788 = vadd.f32 %v776, %v786
      %v789 = vadd.f32 %v777, %v787
      %790 = vrot.lane.b32.xlu0 %v727, 126
      %v791 = vpop.permute.xlu0 %790
      %792 = vrot.lane.b32.xlu0 %v728, 126
      %v793 = vpop.permute.xlu0 %792
      %v794 = vlaneseq
      %v795 = vshrl.u32 %v794, 7
      %v796 = vsub.s32 0, %v795
      %v797 = vrot.slane %v734, %v796
      %v798 = vmul.f32 %v791, %v797
      %v799 = vmul.f32 %v793, %v797
      %v800 = vadd.f32 %v788, %v798
      %v801 = vadd.f32 %v789, %v799
      %802 = vrot.lane.b32.xlu0 %v727, 125
      %v803 = vpop.permute.xlu0 %802
      %804 = vrot.lane.b32.xlu0 %v728, 125
      %v805 = vpop.permute.xlu0 %804
      %v806 = vlaneseq
      %v807 = vshrl.u32 %v806, 7
      %v808 = vsub.s32 0, %v807
      %v809 = vrot.slane %v735, %v808
      %v810 = vmul.f32 %v803, %v809
      %v811 = vmul.f32 %v805, %v809
      %v812 = vadd.f32 %v800, %v810
      %v813 = vadd.f32 %v801, %v811
      %v814 = vadd.f32 %v812, %v813
      %v815 = vrot.slane %v814, 4
      %v816 = vadd.f32 %v814, %v815
      %v817 = vrot.slane %v816, 2
      %v818 = vadd.f32 %v816, %v817
      %v819 = vrot.slane %v818, 1
      %v820 = vadd.f32 %v818, %v819
      %v821 = vmul.f32 %v812, %v812
      %v822 = vmul.f32 %v813, %v813
      %v823 = vadd.f32 %v821, %v822
      %v824 = vrot.slane %v823, 4
      %v825 = vadd.f32 %v823, %v824
      %v826 = vrot.slane %v825, 2
      %v827 = vadd.f32 %v825, %v826
      %v828 = vrot.slane %v827, 1
      %v829 = vadd.f32 %v827, %v828
      %vm830 = vcmask 1040384
      %v831 = vsel %vm830, %v820, %v829
      %v832 = vld [vmem:[%s8] sm:$0xff]
      %v833 = vld [vmem:[%s8 + $0x8] sm:$0xff]
      %v834 = vld [vmem:[%s8 + $0x10] sm:$0xff]
      %v835 = vld [vmem:[%s8 + $0x18] sm:$0xff]
      %v836 = vld [vmem:[%s8 + $0x20] sm:$0xff]
      %v837 = vld [vmem:[%s8 + $0x28] sm:$0xff]
      %v838 = vld [vmem:[%s8 + $0x30] sm:$0xff]
      %v839 = vld [vmem:[%s8 + $0x38] sm:$0xff]
      %v840 = vld [vmem:[%s8 + $0x40] sm:$0xff]
      %v841 = vld [vmem:[%s8 + $0x48] sm:$0xff]
      %v842 = vld [vmem:[%s8 + $0x50] sm:$0xff]
      %v843 = vld [vmem:[%s8 + $0x58] sm:$0xff]
      %v844 = vld [vmem:[%s8 + $0x60] sm:$0xff]
      %v845 = vld [vmem:[%s8 + $0x68] sm:$0xff]
      %v846 = vld [vmem:[%s8 + $0x70] sm:$0xff]
      %v847 = vld [vmem:[%s8 + $0x78] sm:$0xff]
      %848 = vmatprep.subr.mxu0 0.0
      %849 = vmatpush1.msra.mxu0 %v847
      %850 = vmatprep.subr.mxu0 0.0
      %851 = vmatpush1.msra.mxu0 %v846
      %852 = vmatprep.subr.mxu0 0.0
      %853 = vmatpush1.msra.mxu0 %v845
      %854 = vmatprep.subr.mxu0 0.0
      %855 = vmatpush1.msra.mxu0 %v844
      %856 = vmatprep.subr.mxu0 0.0
      %857 = vmatpush1.msra.mxu0 %v843
      %858 = vmatprep.subr.mxu0 0.0
      %859 = vmatpush1.msra.mxu0 %v842
      %860 = vmatprep.subr.mxu0 0.0
      %861 = vmatpush1.msra.mxu0 %v841
      %862 = vmatprep.subr.mxu0 0.0
      %863 = vmatpush1.msra.mxu0 %v840
      %864 = vmatprep.subr.mxu0 0.0
      %865 = vmatpush1.msra.mxu0 %v839
      %866 = vmatprep.subr.mxu0 0.0
      %867 = vmatpush1.msra.mxu0 %v838
      %868 = vmatprep.subr.mxu0 0.0
      %869 = vmatpush1.msra.mxu0 %v837
      %870 = vmatprep.subr.mxu0 0.0
      %871 = vmatpush1.msra.mxu0 %v836
      %872 = vmatprep.subr.mxu0 0.0
      %873 = vmatpush1.msra.mxu0 %v835
      %874 = vmatprep.subr.mxu0 0.0
      %875 = vmatpush1.msra.mxu0 %v834
      %876 = vmatprep.subr.mxu0 0.0
      %877 = vmatpush1.msra.mxu0 %v833
      %878 = vmatprep.subr.mxu0 0.0
      %879 = vmatpush1.msra.mxu0 %v832
      %880 = vmatprep.subr.mxu0 0.0
      %881 = vmatpush2.msra.mxu0 0.0
      %882 = vmatprep.subr.mxu0 0.0
      %883 = vmatpush2.msra.mxu0 0.0
      %884 = vmatprep.subr.mxu0 0.0
      %885 = vmatpush2.msra.mxu0 0.0
      %886 = vmatprep.subr.mxu0 0.0
      %887 = vmatpush2.msra.mxu0 0.0
      %888 = vmatprep.subr.mxu0 0.0
      %889 = vmatpush2.msra.mxu0 0.0
      %890 = vmatprep.subr.mxu0 0.0
      %891 = vmatpush2.msra.mxu0 0.0
      %892 = vmatprep.subr.mxu0 0.0
      %893 = vmatpush2.msra.mxu0 0.0
      %894 = vmatprep.subr.mxu0 0.0
      %895 = vmatpush2.msra.mxu0 0.0
      %896 = vmatprep.subr.mxu0 0.0
      %897 = vmatpush2.msra.mxu0 0.0
      %898 = vmatprep.subr.mxu0 0.0
      %899 = vmatpush2.msra.mxu0 0.0
      %900 = vmatprep.subr.mxu0 0.0
      %901 = vmatpush2.msra.mxu0 0.0
      %902 = vmatprep.subr.mxu0 0.0
      %903 = vmatpush2.msra.mxu0 0.0
      %904 = vmatprep.subr.mxu0 0.0
      %905 = vmatpush2.msra.mxu0 0.0
      %906 = vmatprep.subr.mxu0 0.0
      %907 = vmatpush2.msra.mxu0 0.0
      %908 = vmatprep.subr.mxu0 0.0
      %909 = vmatpush2.msra.mxu0 0.0
      %910 = vmatprep.subr.mxu0 0.0
      %911 = vmatpush2.msra.mxu0 0.0
      %912 = vmatprep.mubr.f32.mxu0 0.0
      %913 = vmatmul.mubr.f32.gmra.mxu0 %v831
      %v914 = vpop.f32.mrf.mxu0
      %v915 = vadd.f32 0.0, %v914
      %v916 = vpop.f32.mrf.mxu0
      %917 = vdwg.mxu0
      %v918 = vld [vmem:[%s9] sm:$0xff]
      %vm919 = vcmask 64512
      %v921 = vsel %vm919, %v915, 0
      %923 = vmatprep.subr.mxu0 0.0
      %924 = vmatpush1.msra.mxu0 0.0
      %925 = vmatprep.subr.mxu0 0.0
      %926 = vmatpush1.msra.mxu0 0.0
      %927 = vmatprep.subr.mxu0 0.0
      %928 = vmatpush1.msra.mxu0 0.0
      %929 = vmatprep.subr.mxu0 0.0
      %930 = vmatpush1.msra.mxu0 0.0
      %931 = vmatprep.subr.mxu0 0.0
      %932 = vmatpush1.msra.mxu0 0.0
      %933 = vmatprep.subr.mxu0 0.0
      %934 = vmatpush1.msra.mxu0 0.0
      %935 = vmatprep.subr.mxu0 0.0
      %936 = vmatpush1.msra.mxu0 0.0
      %937 = vmatprep.subr.mxu0 0.0
      %938 = vmatpush1.msra.mxu0 0.0
      %939 = vmatprep.subr.mxu0 0.0
      %940 = vmatpush1.msra.mxu0 0.0
      %941 = vmatprep.subr.mxu0 0.0
      %942 = vmatpush1.msra.mxu0 0.0
      %943 = vmatprep.subr.mxu0 0.0
      %944 = vmatpush1.msra.mxu0 0.0
      %945 = vmatprep.subr.mxu0 0.0
      %946 = vmatpush1.msra.mxu0 0.0
      %947 = vmatprep.subr.mxu0 0.0
      %948 = vmatpush1.msra.mxu0 0.0
      %949 = vmatprep.subr.mxu0 0.0
      %950 = vmatpush1.msra.mxu0 0.0
      %951 = vmatprep.subr.mxu0 0.0
      %952 = vmatpush1.msra.mxu0 0.0
      %953 = vmatprep.subr.mxu0 0.0
      %954 = vmatpush1.msra.mxu0 %v918
      %955 = vmatprep.subr.mxu0 0.0
      %956 = vmatpush2.msra.mxu0 0.0
      %957 = vmatprep.subr.mxu0 0.0
      %958 = vmatpush2.msra.mxu0 0.0
      %959 = vmatprep.subr.mxu0 0.0
      %960 = vmatpush2.msra.mxu0 0.0
      %961 = vmatprep.subr.mxu0 0.0
      %962 = vmatpush2.msra.mxu0 0.0
      %963 = vmatprep.subr.mxu0 0.0
      %964 = vmatpush2.msra.mxu0 0.0
      %965 = vmatprep.subr.mxu0 0.0
      %966 = vmatpush2.msra.mxu0 0.0
      %967 = vmatprep.subr.mxu0 0.0
      %968 = vmatpush2.msra.mxu0 0.0
      %969 = vmatprep.subr.mxu0 0.0
      %970 = vmatpush2.msra.mxu0 0.0
      %971 = vmatprep.subr.mxu0 0.0
      %972 = vmatpush2.msra.mxu0 0.0
      %973 = vmatprep.subr.mxu0 0.0
      %974 = vmatpush2.msra.mxu0 0.0
      %975 = vmatprep.subr.mxu0 0.0
      %976 = vmatpush2.msra.mxu0 0.0
      %977 = vmatprep.subr.mxu0 0.0
      %978 = vmatpush2.msra.mxu0 0.0
      %979 = vmatprep.subr.mxu0 0.0
      %980 = vmatpush2.msra.mxu0 0.0
      %981 = vmatprep.subr.mxu0 0.0
      %982 = vmatpush2.msra.mxu0 0.0
      %983 = vmatprep.subr.mxu0 0.0
      %984 = vmatpush2.msra.mxu0 0.0
      %985 = vmatprep.subr.mxu0 0.0
      %986 = vmatpush2.msra.mxu0 0.0
      %987 = vmatprep.mubr.f32.mxu0 0.0
      %988 = vmatmul.mubr.f32.gmra.mxu0 %v921
      %v989 = vpop.f32.mrf.mxu0
      %v990 = vadd.f32 0.0, %v989
      %v991 = vpop.f32.mrf.mxu0
      %992 = vdwg.mxu0
      %v993 = vmul.f32 %v990, %v990
      %v995 = vrot.slane %v993, 7
      %v997 = vsub.f32 %v990, %v995
      %v998 = vmax.f32 %v997, 0.0
      %v999 = vlaneseq
      %v1000 = vshrl.u32 %v999, 7
      %v1001 = vsub.s32 0, %v1000
      %v1002 = vrot.slane %v990, %v1001
      %v1003 = vsub.f32 %v812, %v1002
      %v1004 = vsub.f32 %v813, %v1002
      %v1005 = vadd.f32 %v998, 1e-05
      %v1006 = vrsqrt.pop %v1005
      %v1007 = vlaneseq
      %v1008 = vshrl.u32 %v1007, 7
      %v1009 = vsub.s32 1, %v1008
      %v1010 = vrot.slane %v1006, %v1009
      %v1011 = vmul.f32 %v1003, %v1010
      %v1012 = vmul.f32 %v1004, %v1010
      %v1013 = vmax.f32 %v1011, 0.0
      %v1014 = vmax.f32 %v1012, 0.0
      %v1015 = vld [vmem:[%s6] sm:$0x1]
      %v1016 = vld [vmem:[%s6 + $0x1] sm:$0x1]
      %v1017 = vld [vmem:[%s6 + $0x2] sm:$0x1]
      %v1018 = vld [vmem:[%s6 + $0x3] sm:$0x1]
      %v1019 = vld [vmem:[%s6 + $0x4] sm:$0x1]
      %v1020 = vld [vmem:[%s6 + $0x5] sm:$0x1]
      %v1021 = vld [vmem:[%s6 + $0x6] sm:$0x1]
      %v1022 = vld [vmem:[%s6 + $0x7] sm:$0x1]
      %v1023 = vld [vmem:[%s6 + $0x8] sm:$0x1]
      %v1024 = vrot.slane %v1013, 7
      %v1025 = vrot.slane %v1014, 7
      %v1026 = vsel %vm623, %v1024, %v1025
      %v1027 = vsel %vm623, %v1025, %v1024
      %v1028 = vmul.f32 %v1027, %v59
      %v1029 = vmul.f32 %v1026, %v60
      %v1030 = vrot.slane %v1013, 1
      %v1031 = vrot.slane %v1014, 1
      %v1032 = vsel %vm630, %v1030, %v1031
      %v1033 = vsel %vm630, %v1031, %v1030
      %v1034 = vmul.f32 %v1032, %v63
      %v1035 = vmul.f32 %v1033, %v64
      %1036 = vrot.lane.b32.xlu0 %v1028, 4
      %v1037 = vpop.permute.xlu0 %1036
      %1038 = vrot.lane.b32.xlu0 %v1029, 4
      %v1039 = vpop.permute.xlu0 %1038
      %1040 = vrot.lane.b32.xlu0 %v1028, 124
      %v1041 = vpop.permute.xlu0 %1040
      %1042 = vrot.lane.b32.xlu0 %v1029, 124
      %v1043 = vpop.permute.xlu0 %1042
      %v1044 = vlaneseq
      %v1045 = vshrl.u32 %v1044, 7
      %v1046 = vsub.s32 0, %v1045
      %v1047 = vrot.slane %v1015, %v1046
      %v1048 = vmul.f32 %v1037, %v1047
      %v1049 = vmul.f32 %v1039, %v1047
      %v1050 = vlaneseq
      %v1051 = vshrl.u32 %v1050, 7
      %v1052 = vsub.s32 0, %v1051
      %v1053 = vrot.slane %v1016, %v1052
      %v1054 = vmul.f32 %v1028, %v1053
      %v1055 = vmul.f32 %v1029, %v1053
      %v1056 = vadd.f32 %v1048, %v1054
      %v1057 = vadd.f32 %v1049, %v1055
      %v1058 = vlaneseq
      %v1059 = vshrl.u32 %v1058, 7
      %v1060 = vsub.s32 0, %v1059
      %v1061 = vrot.slane %v1017, %v1060
      %v1062 = vmul.f32 %v1041, %v1061
      %v1063 = vmul.f32 %v1043, %v1061
      %v1064 = vadd.f32 %v1056, %v1062
      %v1065 = vadd.f32 %v1057, %v1063
      %1066 = vrot.lane.b32.xlu0 %v1013, 4
      %v1067 = vpop.permute.xlu0 %1066
      %1068 = vrot.lane.b32.xlu0 %v1014, 4
      %v1069 = vpop.permute.xlu0 %1068
      %1070 = vrot.lane.b32.xlu0 %v1013, 124
      %v1071 = vpop.permute.xlu0 %1070
      %1072 = vrot.lane.b32.xlu0 %v1014, 124
      %v1073 = vpop.permute.xlu0 %1072
      %v1074 = vlaneseq
      %v1075 = vshrl.u32 %v1074, 7
      %v1076 = vsub.s32 0, %v1075
      %v1077 = vrot.slane %v1018, %v1076
      %v1078 = vmul.f32 %v1067, %v1077
      %v1079 = vmul.f32 %v1069, %v1077
      %v1080 = vadd.f32 %v1064, %v1078
      %v1081 = vadd.f32 %v1065, %v1079
      %v1082 = vlaneseq
      %v1083 = vshrl.u32 %v1082, 7
      %v1084 = vsub.s32 0, %v1083
      %v1085 = vrot.slane %v1019, %v1084
      %v1086 = vmul.f32 %v1013, %v1085
      %v1087 = vmul.f32 %v1014, %v1085
      %v1088 = vadd.f32 %v1080, %v1086
      %v1089 = vadd.f32 %v1081, %v1087
      %v1090 = vlaneseq
      %v1091 = vshrl.u32 %v1090, 7
      %v1092 = vsub.s32 0, %v1091
      %v1093 = vrot.slane %v1020, %v1092
      %v1094 = vmul.f32 %v1071, %v1093
      %v1095 = vmul.f32 %v1073, %v1093
      %v1096 = vadd.f32 %v1088, %v1094
      %v1097 = vadd.f32 %v1089, %v1095
      %1098 = vrot.lane.b32.xlu0 %v1034, 4
      %v1099 = vpop.permute.xlu0 %1098
      %1100 = vrot.lane.b32.xlu0 %v1035, 4
      %v1101 = vpop.permute.xlu0 %1100
      %1102 = vrot.lane.b32.xlu0 %v1034, 124
      %v1103 = vpop.permute.xlu0 %1102
      %1104 = vrot.lane.b32.xlu0 %v1035, 124
      %v1105 = vpop.permute.xlu0 %1104
      %v1106 = vlaneseq
      %v1107 = vshrl.u32 %v1106, 7
      %v1108 = vsub.s32 0, %v1107
      %v1109 = vrot.slane %v1021, %v1108
      %v1110 = vmul.f32 %v1099, %v1109
      %v1111 = vmul.f32 %v1101, %v1109
      %v1112 = vadd.f32 %v1096, %v1110
      %v1113 = vadd.f32 %v1097, %v1111
      %v1114 = vlaneseq
      %v1115 = vshrl.u32 %v1114, 7
      %v1116 = vsub.s32 0, %v1115
      %v1117 = vrot.slane %v1022, %v1116
      %v1118 = vmul.f32 %v1034, %v1117
      %v1119 = vmul.f32 %v1035, %v1117
      %v1120 = vadd.f32 %v1112, %v1118
      %v1121 = vadd.f32 %v1113, %v1119
      %v1122 = vlaneseq
      %v1123 = vshrl.u32 %v1122, 7
      %v1124 = vsub.s32 0, %v1123
      %v1125 = vrot.slane %v1023, %v1124
      %v1126 = vmul.f32 %v1103, %v1125
      %v1127 = vmul.f32 %v1105, %v1125
      %v1128 = vadd.f32 %v1120, %v1126
      %v1129 = vadd.f32 %v1121, %v1127
      %v1130 = vld [vmem:[%s7] sm:$0x1]
      %v1131 = vld [vmem:[%s7 + $0x1] sm:$0x1]
      %v1132 = vld [vmem:[%s7 + $0x2] sm:$0x1]
      %v1133 = vld [vmem:[%s7 + $0x3] sm:$0x1]
      %v1134 = vld [vmem:[%s7 + $0x4] sm:$0x1]
      %v1135 = vld [vmem:[%s7 + $0x5] sm:$0x1]
      %v1136 = vld [vmem:[%s7 + $0x6] sm:$0x1]
      %v1137 = vlaneseq
      %v1138 = vshrl.u32 %v1137, 7
      %v1139 = vsub.s32 0, %v1138
      %v1140 = vrot.slane %v1133, %v1139
      %v1141 = vmul.f32 %v1128, %v1140
      %v1142 = vmul.f32 %v1129, %v1140
      %1143 = vrot.lane.b32.xlu0 %v1128, 3
      %v1144 = vpop.permute.xlu0 %1143
      %1145 = vrot.lane.b32.xlu0 %v1129, 3
      %v1146 = vpop.permute.xlu0 %1145
      %v1147 = vlaneseq
      %v1148 = vshrl.u32 %v1147, 7
      %v1149 = vsub.s32 0, %v1148
      %v1150 = vrot.slane %v1130, %v1149
      %v1151 = vmul.f32 %v1144, %v1150
      %v1152 = vmul.f32 %v1146, %v1150
      %v1153 = vadd.f32 %v1141, %v1151
      %v1154 = vadd.f32 %v1142, %v1152
      %1155 = vrot.lane.b32.xlu0 %v1128, 2
      %v1156 = vpop.permute.xlu0 %1155
      %1157 = vrot.lane.b32.xlu0 %v1129, 2
      %v1158 = vpop.permute.xlu0 %1157
      %v1159 = vlaneseq
      %v1160 = vshrl.u32 %v1159, 7
      %v1161 = vsub.s32 0, %v1160
      %v1162 = vrot.slane %v1131, %v1161
      %v1163 = vmul.f32 %v1156, %v1162
      %v1164 = vmul.f32 %v1158, %v1162
      %v1165 = vadd.f32 %v1153, %v1163
      %v1166 = vadd.f32 %v1154, %v1164
      %1167 = vrot.lane.b32.xlu0 %v1128, 1
      %v1168 = vpop.permute.xlu0 %1167
      %1169 = vrot.lane.b32.xlu0 %v1129, 1
      %v1170 = vpop.permute.xlu0 %1169
      %v1171 = vlaneseq
      %v1172 = vshrl.u32 %v1171, 7
      %v1173 = vsub.s32 0, %v1172
      %v1174 = vrot.slane %v1132, %v1173
      %v1175 = vmul.f32 %v1168, %v1174
      %v1176 = vmul.f32 %v1170, %v1174
      %v1177 = vadd.f32 %v1165, %v1175
      %v1178 = vadd.f32 %v1166, %v1176
      %1179 = vrot.lane.b32.xlu0 %v1128, 127
      %v1180 = vpop.permute.xlu0 %1179
      %1181 = vrot.lane.b32.xlu0 %v1129, 127
      %v1182 = vpop.permute.xlu0 %1181
      %v1183 = vlaneseq
      %v1184 = vshrl.u32 %v1183, 7
      %v1185 = vsub.s32 0, %v1184
      %v1186 = vrot.slane %v1134, %v1185
      %v1187 = vmul.f32 %v1180, %v1186
      %v1188 = vmul.f32 %v1182, %v1186
      %v1189 = vadd.f32 %v1177, %v1187
      %v1190 = vadd.f32 %v1178, %v1188
      %1191 = vrot.lane.b32.xlu0 %v1128, 126
      %v1192 = vpop.permute.xlu0 %1191
      %1193 = vrot.lane.b32.xlu0 %v1129, 126
      %v1194 = vpop.permute.xlu0 %1193
      %v1195 = vlaneseq
      %v1196 = vshrl.u32 %v1195, 7
      %v1197 = vsub.s32 0, %v1196
      %v1198 = vrot.slane %v1135, %v1197
      %v1199 = vmul.f32 %v1192, %v1198
      %v1200 = vmul.f32 %v1194, %v1198
      %v1201 = vadd.f32 %v1189, %v1199
      %v1202 = vadd.f32 %v1190, %v1200
      %1203 = vrot.lane.b32.xlu0 %v1128, 125
      %v1204 = vpop.permute.xlu0 %1203
      %1205 = vrot.lane.b32.xlu0 %v1129, 125
      %v1206 = vpop.permute.xlu0 %1205
      %v1207 = vlaneseq
      %v1208 = vshrl.u32 %v1207, 7
      %v1209 = vsub.s32 0, %v1208
      %v1210 = vrot.slane %v1136, %v1209
      %v1211 = vmul.f32 %v1204, %v1210
      %v1212 = vmul.f32 %v1206, %v1210
      %v1213 = vadd.f32 %v1201, %v1211
      %v1214 = vadd.f32 %v1202, %v1212
      %v1215 = vadd.f32 %v1213, %v1214
      %v1216 = vrot.slane %v1215, 4
      %v1217 = vadd.f32 %v1215, %v1216
      %v1218 = vrot.slane %v1217, 2
      %v1219 = vadd.f32 %v1217, %v1218
      %v1220 = vrot.slane %v1219, 1
      %v1221 = vadd.f32 %v1219, %v1220
      %v1222 = vmul.f32 %v1213, %v1213
      %v1223 = vmul.f32 %v1214, %v1214
      %v1224 = vadd.f32 %v1222, %v1223
      %v1225 = vrot.slane %v1224, 4
      %v1226 = vadd.f32 %v1224, %v1225
      %v1227 = vrot.slane %v1226, 2
      %v1228 = vadd.f32 %v1226, %v1227
      %v1229 = vrot.slane %v1228, 1
      %v1230 = vadd.f32 %v1228, %v1229
      %v1231 = vsel %vm830, %v1221, %v1230
      %1232 = vmatprep.subr.mxu0 0.0
      %1233 = vmatpush1.msra.mxu0 %v847
      %1234 = vmatprep.subr.mxu0 0.0
      %1235 = vmatpush1.msra.mxu0 %v846
      %1236 = vmatprep.subr.mxu0 0.0
      %1237 = vmatpush1.msra.mxu0 %v845
      %1238 = vmatprep.subr.mxu0 0.0
      %1239 = vmatpush1.msra.mxu0 %v844
      %1240 = vmatprep.subr.mxu0 0.0
      %1241 = vmatpush1.msra.mxu0 %v843
      %1242 = vmatprep.subr.mxu0 0.0
      %1243 = vmatpush1.msra.mxu0 %v842
      %1244 = vmatprep.subr.mxu0 0.0
      %1245 = vmatpush1.msra.mxu0 %v841
      %1246 = vmatprep.subr.mxu0 0.0
      %1247 = vmatpush1.msra.mxu0 %v840
      %1248 = vmatprep.subr.mxu0 0.0
      %1249 = vmatpush1.msra.mxu0 %v839
      %1250 = vmatprep.subr.mxu0 0.0
      %1251 = vmatpush1.msra.mxu0 %v838
      %1252 = vmatprep.subr.mxu0 0.0
      %1253 = vmatpush1.msra.mxu0 %v837
      %1254 = vmatprep.subr.mxu0 0.0
      %1255 = vmatpush1.msra.mxu0 %v836
      %1256 = vmatprep.subr.mxu0 0.0
      %1257 = vmatpush1.msra.mxu0 %v835
      %1258 = vmatprep.subr.mxu0 0.0
      %1259 = vmatpush1.msra.mxu0 %v834
      %1260 = vmatprep.subr.mxu0 0.0
      %1261 = vmatpush1.msra.mxu0 %v833
      %1262 = vmatprep.subr.mxu0 0.0
      %1263 = vmatpush1.msra.mxu0 %v832
      %1264 = vmatprep.subr.mxu0 0.0
      %1265 = vmatpush2.msra.mxu0 0.0
      %1266 = vmatprep.subr.mxu0 0.0
      %1267 = vmatpush2.msra.mxu0 0.0
      %1268 = vmatprep.subr.mxu0 0.0
      %1269 = vmatpush2.msra.mxu0 0.0
      %1270 = vmatprep.subr.mxu0 0.0
      %1271 = vmatpush2.msra.mxu0 0.0
      %1272 = vmatprep.subr.mxu0 0.0
      %1273 = vmatpush2.msra.mxu0 0.0
      %1274 = vmatprep.subr.mxu0 0.0
      %1275 = vmatpush2.msra.mxu0 0.0
      %1276 = vmatprep.subr.mxu0 0.0
      %1277 = vmatpush2.msra.mxu0 0.0
      %1278 = vmatprep.subr.mxu0 0.0
      %1279 = vmatpush2.msra.mxu0 0.0
      %1280 = vmatprep.subr.mxu0 0.0
      %1281 = vmatpush2.msra.mxu0 0.0
      %1282 = vmatprep.subr.mxu0 0.0
      %1283 = vmatpush2.msra.mxu0 0.0
      %1284 = vmatprep.subr.mxu0 0.0
      %1285 = vmatpush2.msra.mxu0 0.0
      %1286 = vmatprep.subr.mxu0 0.0
      %1287 = vmatpush2.msra.mxu0 0.0
      %1288 = vmatprep.subr.mxu0 0.0
      %1289 = vmatpush2.msra.mxu0 0.0
      %1290 = vmatprep.subr.mxu0 0.0
      %1291 = vmatpush2.msra.mxu0 0.0
      %1292 = vmatprep.subr.mxu0 0.0
      %1293 = vmatpush2.msra.mxu0 0.0
      %1294 = vmatprep.subr.mxu0 0.0
      %1295 = vmatpush2.msra.mxu0 0.0
      %1296 = vmatprep.mubr.f32.mxu0 0.0
      %1297 = vmatmul.mubr.f32.gmra.mxu0 %v1231
      %v1298 = vpop.f32.mrf.mxu0
      %v1299 = vadd.f32 0.0, %v1298
      %v1300 = vpop.f32.mrf.mxu0
      %1301 = vdwg.mxu0
      %v1303 = vsel %vm919, %v1299, 0
      %1305 = vmatprep.subr.mxu0 0.0
      %1306 = vmatpush1.msra.mxu0 0.0
      %1307 = vmatprep.subr.mxu0 0.0
      %1308 = vmatpush1.msra.mxu0 0.0
      %1309 = vmatprep.subr.mxu0 0.0
      %1310 = vmatpush1.msra.mxu0 0.0
      %1311 = vmatprep.subr.mxu0 0.0
      %1312 = vmatpush1.msra.mxu0 0.0
      %1313 = vmatprep.subr.mxu0 0.0
      %1314 = vmatpush1.msra.mxu0 0.0
      %1315 = vmatprep.subr.mxu0 0.0
      %1316 = vmatpush1.msra.mxu0 0.0
      %1317 = vmatprep.subr.mxu0 0.0
      %1318 = vmatpush1.msra.mxu0 0.0
      %1319 = vmatprep.subr.mxu0 0.0
      %1320 = vmatpush1.msra.mxu0 0.0
      %1321 = vmatprep.subr.mxu0 0.0
      %1322 = vmatpush1.msra.mxu0 0.0
      %1323 = vmatprep.subr.mxu0 0.0
      %1324 = vmatpush1.msra.mxu0 0.0
      %1325 = vmatprep.subr.mxu0 0.0
      %1326 = vmatpush1.msra.mxu0 0.0
      %1327 = vmatprep.subr.mxu0 0.0
      %1328 = vmatpush1.msra.mxu0 0.0
      %1329 = vmatprep.subr.mxu0 0.0
      %1330 = vmatpush1.msra.mxu0 0.0
      %1331 = vmatprep.subr.mxu0 0.0
      %1332 = vmatpush1.msra.mxu0 0.0
      %1333 = vmatprep.subr.mxu0 0.0
      %1334 = vmatpush1.msra.mxu0 0.0
      %1335 = vmatprep.subr.mxu0 0.0
      %1336 = vmatpush1.msra.mxu0 %v918
      %1337 = vmatprep.subr.mxu0 0.0
      %1338 = vmatpush2.msra.mxu0 0.0
      %1339 = vmatprep.subr.mxu0 0.0
      %1340 = vmatpush2.msra.mxu0 0.0
      %1341 = vmatprep.subr.mxu0 0.0
      %1342 = vmatpush2.msra.mxu0 0.0
      %1343 = vmatprep.subr.mxu0 0.0
      %1344 = vmatpush2.msra.mxu0 0.0
      %1345 = vmatprep.subr.mxu0 0.0
      %1346 = vmatpush2.msra.mxu0 0.0
      %1347 = vmatprep.subr.mxu0 0.0
      %1348 = vmatpush2.msra.mxu0 0.0
      %1349 = vmatprep.subr.mxu0 0.0
      %1350 = vmatpush2.msra.mxu0 0.0
      %1351 = vmatprep.subr.mxu0 0.0
      %1352 = vmatpush2.msra.mxu0 0.0
      %1353 = vmatprep.subr.mxu0 0.0
      %1354 = vmatpush2.msra.mxu0 0.0
      %1355 = vmatprep.subr.mxu0 0.0
      %1356 = vmatpush2.msra.mxu0 0.0
      %1357 = vmatprep.subr.mxu0 0.0
      %1358 = vmatpush2.msra.mxu0 0.0
      %1359 = vmatprep.subr.mxu0 0.0
      %1360 = vmatpush2.msra.mxu0 0.0
      %1361 = vmatprep.subr.mxu0 0.0
      %1362 = vmatpush2.msra.mxu0 0.0
      %1363 = vmatprep.subr.mxu0 0.0
      %1364 = vmatpush2.msra.mxu0 0.0
      %1365 = vmatprep.subr.mxu0 0.0
      %1366 = vmatpush2.msra.mxu0 0.0
      %1367 = vmatprep.subr.mxu0 0.0
      %1368 = vmatpush2.msra.mxu0 0.0
      %1369 = vmatprep.mubr.f32.mxu0 0.0
      %1370 = vmatmul.mubr.f32.gmra.mxu0 %v1303
      %v1371 = vpop.f32.mrf.mxu0
      %v1372 = vadd.f32 0.0, %v1371
      %v1373 = vpop.f32.mrf.mxu0
      %1374 = vdwg.mxu0
      %v1375 = vmul.f32 %v1372, %v1372
      %v1377 = vrot.slane %v1375, 7
      %v1379 = vsub.f32 %v1372, %v1377
      %v1380 = vmax.f32 %v1379, 0.0
      %v1381 = vlaneseq
      %v1382 = vshrl.u32 %v1381, 7
      %v1383 = vsub.s32 0, %v1382
      %v1384 = vrot.slane %v1372, %v1383
      %v1385 = vsub.f32 %v1213, %v1384
      %v1386 = vsub.f32 %v1214, %v1384
      %v1387 = vadd.f32 %v1380, 1e-05
      %v1388 = vrsqrt.pop %v1387
      %v1389 = vstv %s609
      %v1390 = vmul.f32 %v1389, %v1388
      %v1391 = vlaneseq
      %v1392 = vshrl.u32 %v1391, 7
      %v1393 = vsub.s32 1, %v1392
      %v1394 = vrot.slane %v1390, %v1393
      %v1395 = vmul.f32 %v1385, %v1394
      %v1396 = vmul.f32 %v1386, %v1394
      %v1397 = vadd.f32 %v607, %v1395
      %v1398 = vadd.f32 %v608, %v1396
      %1399 = vst [vmem:[#allocation2] sm:$0xff] %v1397
      %1400 = vst [vmem:[#allocation2 + $0x8] sm:$0xff] %v1398
    $region57: #{fwd.1} parent=1 // pred_fallthru
      _
    %v1401 = vld [vmem:[#allocation2] sm:$0xff]
    %v1402 = vld [vmem:[#allocation2 + $0x8] sm:$0xff]
    %1403 = vst [vmem:[%s10] sm:$0xff] %v1401
    %1404 = vst [vmem:[%s10 + $0x8] sm:$0xff] %v1402
    // Predicated region
    $region58: #{fwd.1} parent=1 // pred_check
      _
    $region59: #{fwd.1} parent=1 // pred_check_branch
      %1406 = sbr.rel (0) target = $region61
    $region60: #{fwd.1} parent=1 // pred_region
      _
    $region61: #{fwd.1} parent=1 // pred_fallthru
      _
    // Predicated region
    $region62: #{fwd.1} parent=1 // pred_check
      _
    $region63: #{fwd.1} parent=1 // pred_check_branch
      %1408 = sbr.rel (0) target = $region65
    $region64: #{fwd.1} parent=1 // pred_region
      _
    $region65: #{fwd.1} parent=1 // pred_fallthru
      _
    %1409 = vsyncpa [#allocation4], 1

</llo_original>
